<compile_context>
chip_gen: v7x
topology: tpu7x:2x2x1
jax: 0.10.0
libtpu: 0.0.40
codegen_flags: <defaults>
</compile_context>

<pallas_src>
import math
from functools import partial

import jax
import jax.numpy as jnp
from jax.experimental import pallas as pl
from jax.experimental.pallas import tpu as pltpu

_COMPUTE_DTYPE = jnp.bfloat16   # MXU operand dtype (accumulation stays f32)
_LANE = 128


def _round_up(x, m):
    return (x + m - 1) // m * m


def _pad_last(a, target):
    pad = target - a.shape[-1]
    if pad == 0:
        return a
    return jnp.pad(a, [(0, 0)] * (a.ndim - 1) + [(0, pad)])


def _pad_last2(a, rows, cols):
    pr, pc = rows - a.shape[-2], cols - a.shape[-1]
    if pr == 0 and pc == 0:
        return a
    return jnp.pad(a, [(0, 0)] * (a.ndim - 2) + [(0, pr), (0, pc)])


def _layer_norm(x, w, b, d_real, eps=1e-5):
    # Lane-padded LayerNorm: padded lanes of `x` are zero and `w`/`b` are
    # zero-padded, so sums over the padded extent equal sums over the real
    # `d_real` features, and padded output lanes stay exactly zero.
    inv_d = 1.0 / d_real
    mu = jnp.sum(x, axis=-1, keepdims=True) * inv_d
    var = jnp.sum(x * x, axis=-1, keepdims=True) * inv_d - mu * mu
    var = jnp.maximum(var, 0.0)
    return (x - mu) * jax.lax.rsqrt(var + eps) * w + b


def _softmax_last(x, approx):
    m = jnp.max(x, axis=-1, keepdims=True)
    e = jnp.exp(x - m)
    return e * pl.reciprocal(jnp.sum(e, axis=-1, keepdims=True), approx=approx)


def _transformer_kernel(
    x_ref, emb_w_ref, emb_b_ref,
    qkv_w_ref, qkv_b_ref, out_w_ref, out_b_ref,
    n1_w_ref, n1_b_ref, l1_w_ref, l1_b_ref, l2_w_ref, l2_b_ref,
    n2_w_ref, n2_b_ref, cls_w_ref, cls_b_ref,
    out_ref, h_scr,
    *, nhead, num_layers, d_real,
):
    cdt = _COMPUTE_DTYPE
    layer = pl.program_id(1)
    bb, S, n_in = x_ref.shape
    Dp = emb_w_ref.shape[-1]                 # lane-padded hidden width
    hd = d_real // nhead                     # real head dim
    BS = bb * S

    # --- layer 0: embedding Linear(n_in -> D) into the persistent scratch ---
    # NOTE: h_scr is carried across the innermost "arbitrary" layer axis; the
    # write below must stay at layer == 0 of that axis (do not reorder grid).
    @pl.when(layer == 0)
    def _():
        x2 = x_ref[...].reshape(BS, n_in)
        h = jnp.dot(x2.astype(cdt), emb_w_ref[...],
                    preferred_element_type=jnp.float32) + emb_b_ref[...]
        h_scr[...] = h.reshape(bb, S, Dp)

    h2 = h_scr[...].reshape(BS, Dp)          # f32 activations

    # --- fused QKV projection: one (BS, Dp) x (Dp, 3Dp) MXU matmul.
    #     The 1/sqrt(head_dim) score scale is folded into the Q weights/bias
    #     on the host, so no per-score multiply is needed here.
    qkv = jnp.dot(h2.astype(cdt), qkv_w_ref[...],
                  preferred_element_type=jnp.float32) + qkv_b_ref[...]
    # 128-lane-aligned Q/K/V slices (each projection is padded to Dp lanes).
    q3 = qkv[:, 0 * Dp:1 * Dp].reshape(bb, S, Dp)
    k3 = qkv[:, 1 * Dp:2 * Dp].reshape(bb, S, Dp)
    v3 = qkv[:, 2 * Dp:3 * Dp].reshape(bb, S, Dp)
    # TODO(synk): at large d_model, stage Q/K/V in VMEM scratch slabs
    # (pl.run_scoped) instead of SSA values to bound vreg live ranges across
    # the head loop.

    # --- per-head attention; each head's output is accumulated directly into
    #     the out-projection (no lane-dim concat of head outputs). ---
    attn = jnp.zeros((BS, Dp), jnp.float32)
    for h_idx in range(nhead):
        lo = h_idx * hd
        qh = q3[:, :, lo:lo + hd].astype(cdt)
        kh = k3[:, :, lo:lo + hd].astype(cdt)
        vh = v3[:, :, lo:lo + hd].astype(cdt)
        s = jnp.einsum("bqd,bkd->bqk", qh, kh,
                       preferred_element_type=jnp.float32)
        p = _softmax_last(s, approx=True)                     # f32 softmax
        oh = jnp.einsum("bqk,bkd->bqd", p.astype(cdt), vh,
                        preferred_element_type=jnp.float32)
        attn = attn + jnp.dot(oh.reshape(BS, hd).astype(cdt),
                              out_w_ref[pl.ds(lo, hd), :],
                              preferred_element_type=jnp.float32)
    attn = attn + out_b_ref[...]

    # --- add & norm 1 (f32) ---
    h2 = _layer_norm(h2 + attn, n1_w_ref[...], n1_b_ref[...], d_real)

    # --- feed-forward: Lin -> ReLU -> Lin, flat 2-D matmuls ---
    ff = jnp.dot(h2.astype(cdt), l1_w_ref[...],
                 preferred_element_type=jnp.float32) + l1_b_ref[...]
    ff = jnp.maximum(ff, 0.0)
    ff = jnp.dot(ff.astype(cdt), l2_w_ref[...],
                 preferred_element_type=jnp.float32) + l2_b_ref[...]

    # --- add & norm 2 (f32), persist for the next layer ---
    h2 = _layer_norm(h2 + ff, n2_w_ref[...], n2_b_ref[...], d_real)
    h_scr[...] = h2.reshape(bb, S, Dp)

    # --- last layer: mean over hidden dim, classifier over seq axis, softmax.
    #     Classifier kept entirely in f32 (tiny matmul, avoids precision loss).
    @pl.when(layer == num_layers - 1)
    def _():
        pooled = jnp.sum(h2.reshape(bb, S, Dp), axis=-1) * (1.0 / d_real)
        logits = jnp.dot(pooled, cls_w_ref[...],
                         preferred_element_type=jnp.float32) + cls_b_ref[...]
        out_ref[...] = _softmax_last(logits, approx=False).reshape(bb, 1, -1)


def _vmem_limit_bytes():
    # Per-generation scoped-VMEM budget: ~100 MiB on 128-MiB chips (v5e/v6e),
    # ~56 MiB on v7x's 64-MiB VMEM.  Conservative 64-MiB fallback if the query
    # is unavailable.
    cap = 64 * 1024 * 1024
    try:
        info = pltpu.get_tpu_info()
        cap = int(getattr(info, "vmem_capacity_bytes", cap))
    except Exception:
        pass
    return min(100 * 1024 * 1024, (cap * 7) // 8)


def _auto_batch_block(B, S, n_in, Dp, Fp, vmem_limit, target_rows=256):
    """Largest divisor of B whose activation working set fits the VMEM budget,
    stopping once bb*S reaches `target_rows` MXU rows (256 covers the 256x256
    v6e/v7x MXU; the 128-wide v5e MXU saturates even earlier)."""
    per_layer_w = 2 * 2 * (Dp * 3 * Dp + Dp * Dp + 2 * Dp * Fp)  # bf16, 2 bufs

    def act_bytes(bb):
        bs = bb * S
        return (2 * bb * S * n_in * 4        # double-buffered input block
                + bs * Dp * 4                # persistent activation scratch
                + bs * 3 * Dp * 4            # fused-QKV temporary
                + bs * Fp * 4                # FFN hidden temporary
                + 3 * bs * Dp * 4            # residual / attention temporaries
                + bb * S * S * 4)            # attention scores (one head)

    budget = (vmem_limit * 6) // 10 - per_layer_w
    best = 1
    for bb in range(1, B + 1):
        if B % bb != 0:
            continue
        if bb > 1 and act_bytes(bb) > budget:
            break
        best = bb
        if bb * S >= target_rows:
            break
    return best


@partial(jax.jit, static_argnames=("nhead", "num_layers", "batch_block"))
def transformer_forward(x, params, *, nhead, num_layers, batch_block=None):
    B, S, n_in = x.shape
    L = num_layers
    D = params["emb_w"].shape[0]           # PyTorch layout (out, in)
    F = params["lin1_w"].shape[1]
    n_out = params["cls_w"].shape[0]
    hd = D // nhead
    Dp = _round_up(D, _LANE)
    Fp = _round_up(F, _LANE)
    cdt = _COMPUTE_DTYPE
    f32 = jnp.float32
    scale = 1.0 / math.sqrt(hd)

    vmem_limit = _vmem_limit_bytes()
    bb = batch_block if batch_block is not None else _auto_batch_block(
        B, S, n_in, Dp, Fp, vmem_limit)
    assert B % bb == 0
    nb = B // bb

    # --- host-side, one-time weight prep: transpose to (in, out), fold the
    #     attention score scale into Q, zero-pad D/F to 128 lanes, cast the
    #     matmul weights to bf16. ---
    emb_w = _pad_last(jnp.transpose(params["emb_w"]), Dp).astype(cdt)      # (n_in, Dp)
    emb_b = _pad_last(params["emb_b"], Dp).reshape(1, Dp).astype(f32)

    ipw, ipb = params["in_proj_w"], params["in_proj_b"]                    # (L,3D,D),(L,3D)

    def _proj(w_part, scl):
        return _pad_last2(jnp.swapaxes(w_part, 1, 2) * scl, Dp, Dp)        # (L, Dp, Dp)

    qkv_w = jnp.concatenate(
        [_proj(ipw[:, 0:D], scale),
         _proj(ipw[:, D:2 * D], 1.0),
         _proj(ipw[:, 2 * D:3 * D], 1.0)], axis=-1).astype(cdt)            # (L, Dp, 3Dp)
    qkv_b = jnp.concatenate(
        [_pad_last(ipb[:, 0:D] * scale, Dp),
         _pad_last(ipb[:, D:2 * D], Dp),
         _pad_last(ipb[:, 2 * D:3 * D], Dp)],
        axis=-1).reshape(L, 1, 3 * Dp).astype(f32)

    out_w = _pad_last2(jnp.swapaxes(params["out_proj_w"], 1, 2), Dp, Dp).astype(cdt)
    out_b = _pad_last(params["out_proj_b"], Dp).reshape(L, 1, Dp).astype(f32)
    n1_w = _pad_last(params["norm1_w"], Dp).reshape(L, 1, Dp).astype(f32)
    n1_b = _pad_last(params["norm1_b"], Dp).reshape(L, 1, Dp).astype(f32)
    l1_w = _pad_last2(jnp.swapaxes(params["lin1_w"], 1, 2), Dp, Fp).astype(cdt)
    l1_b = _pad_last(params["lin1_b"], Fp).reshape(L, 1, Fp).astype(f32)
    l2_w = _pad_last2(jnp.swapaxes(params["lin2_w"], 1, 2), Fp, Dp).astype(cdt)
    l2_b = _pad_last(params["lin2_b"], Dp).reshape(L, 1, Dp).astype(f32)
    n2_w = _pad_last(params["norm2_w"], Dp).reshape(L, 1, Dp).astype(f32)
    n2_b = _pad_last(params["norm2_b"], Dp).reshape(L, 1, Dp).astype(f32)
    cls_w = jnp.transpose(params["cls_w"]).astype(f32)                     # (S, n_out)
    cls_b = params["cls_b"].reshape(1, n_out).astype(f32)

    per_layer_args = (qkv_w, qkv_b, out_w, out_b, n1_w, n1_b,
                      l1_w, l1_b, l2_w, l2_b, n2_w, n2_b)
    args = (x, emb_w, emb_b) + per_layer_args + (cls_w, cls_b)

    def full2(a):        # non-layer 2-D params: block index constant -> fetched once
        return pl.BlockSpec(a.shape, lambda b, l: (0, 0))

    def per_layer(a):    # stream one layer per step of the "arbitrary" axis
        return pl.BlockSpec((None,) + a.shape[1:], lambda b, l: (l, 0, 0))

    in_specs = [pl.BlockSpec((bb, S, n_in), lambda b, l: (b, 0, 0)),       # x
                full2(emb_w), full2(emb_b)]
    in_specs += [per_layer(a) for a in per_layer_args]
    in_specs += [full2(cls_w), full2(cls_b)]
    out_spec = pl.BlockSpec((bb, 1, n_out), lambda b, l: (b, 0, 0))

    # Advisory cost estimate; per-layer weights are streamed once per batch block.
    flops = 2 * B * S * n_in * Dp + 2 * B * S * n_out
    flops += L * (2 * B * S * Dp * 3 * Dp + 4 * B * S * S * D
                  + 2 * B * S * D * Dp + 4 * B * S * Dp * Fp)
    transcendentals = L * nhead * B * S * S + B * n_out
    bytes_accessed = (int(x.size) * x.dtype.itemsize + B * n_out * 4
                      + sum(int(a.size) * a.dtype.itemsize
                            for a in (emb_w, emb_b, cls_w, cls_b))
                      + nb * sum(int(a.size) * a.dtype.itemsize
                                 for a in per_layer_args))

    kernel = partial(_transformer_kernel, nhead=nhead, num_layers=num_layers,
                     d_real=D)
    out = pl.pallas_call(
        kernel,
        out_shape=jax.ShapeDtypeStruct((B, 1, n_out), jnp.float32),
        grid_spec=pltpu.PrefetchScalarGridSpec(
            num_scalar_prefetch=0,
            grid=(nb, L),                       # layer axis innermost (streaming)
            in_specs=in_specs,
            out_specs=out_spec,
            # TODO(synk): on v7x a bf16 h_scr would halve the resident
            # activation and allow a larger batch block.
            scratch_shapes=[pltpu.VMEM((bb, S, Dp), jnp.float32)],
        ),
        compiler_params=pltpu.CompilerParams(
            # Batch blocks are independent ("parallel" -> megacore sharding on
            # multi-core parts); the layer axis carries h_scr -> "arbitrary".
            dimension_semantics=("parallel", "arbitrary"),
            vmem_limit_bytes=int(vmem_limit),
        ),
        cost_estimate=pl.CostEstimate(
            flops=int(flops),
            transcendentals=int(transcendentals),
            bytes_accessed=int(bytes_accessed),
        ),
    )(*args)
    return out[:, 0, :]


def _reference_forward(x, params, *, nhead, num_layers):
    """Pure-JAX f32 reference matching the PyTorch module (eval mode)."""
    D = params["emb_w"].shape[0]
    hd = D // nhead
    B, S, _ = x.shape

    def ln(v, w, b):
        mu = jnp.mean(v, -1, keepdims=True)
        var = jnp.mean((v - mu) ** 2, -1, keepdims=True)
        return (v - mu) / jnp.sqrt(var + 1e-5) * w + b

    h = jnp.einsum("bsi,di->bsd", x, params["emb_w"]) + params["emb_b"]
    for l in range(num_layers):
        qkv = jnp.einsum("bsd,ed->bse", h, params["in_proj_w"][l]) + params["in_proj_b"][l]
        q, k, v = jnp.split(qkv, 3, axis=-1)
        q = q.reshape(B, S, nhead, hd).transpose(0, 2, 1, 3)
        k = k.reshape(B, S, nhead, hd).transpose(0, 2, 1, 3)
        v = v.reshape(B, S, nhead, hd).transpose(0, 2, 1, 3)
        s = jnp.einsum("bhqd,bhkd->bhqk", q, k) / math.sqrt(hd)
        p = jax.nn.softmax(s, axis=-1)
        o = jnp.einsum("bhqk,bhkd->bhqd", p, v).transpose(0, 2, 1, 3).reshape(B, S, D)
        o = jnp.einsum("bsd,ed->bse", o, params["out_proj_w"][l]) + params["out_proj_b"][l]
        h = ln(h + o, params["norm1_w"][l], params["norm1_b"][l])
        f = jnp.einsum("bsd,fd->bsf", h, params["lin1_w"][l]) + params["lin1_b"][l]
        f = jax.nn.relu(f)
        f = jnp.einsum("bsf,df->bsd", f, params["lin2_w"][l]) + params["lin2_b"][l]
        h = ln(h + f, params["norm2_w"][l], params["norm2_b"][l])
    pooled = jnp.mean(h, axis=-1)                                  # (B, S)
    logits = jnp.einsum("bs,os->bo", pooled, params["cls_w"]) + params["cls_b"]
    return jax.nn.softmax(logits, axis=-1)


def init_params(key, n_in, n_hidden, n_out, seq_size, nhead, num_layers, dim_ff):
    """Deterministic synthetic params, PyTorch nn.Module state-dict layout."""
    del nhead
    keys = jax.random.split(key, 12)

    def normal(k, shape, scale=0.05):
        return (scale * jax.random.normal(k, shape)).astype(jnp.float32)

    L, D, F = num_layers, n_hidden, dim_ff
    return dict(
        emb_w=normal(keys[0], (D, n_in)),
        emb_b=normal(keys[1], (D,)),
        in_proj_w=normal(keys[2], (L, 3 * D, D)),
        in_proj_b=normal(keys[3], (L, 3 * D)),
        out_proj_w=normal(keys[4], (L, D, D)),
        out_proj_b=normal(keys[5], (L, D)),
        norm1_w=jnp.ones((L, D), jnp.float32),
        norm1_b=jnp.zeros((L, D), jnp.float32),
        lin1_w=normal(keys[6], (L, F, D)),
        lin1_b=normal(keys[7], (L, F)),
        lin2_w=normal(keys[8], (L, D, F)),
        lin2_b=normal(keys[9], (L, D)),
        norm2_w=jnp.ones((L, D), jnp.float32),
        norm2_b=jnp.zeros((L, D), jnp.float32),
        cls_w=normal(keys[10], (n_out, seq_size)),
        cls_b=normal(keys[11], (n_out,)),
    )


if __name__ == "__main__":
    # Small shapes consistent with the module's forward.
    B, SEQ, N_IN, N_HIDDEN, N_OUT = 2, 8, 4, 32, 4
    NHEAD, NUM_LAYERS, DIM_FF = 2, 2, 16

    key = jax.random.PRNGKey(0)
    kx, kp = jax.random.split(key)
    x = jax.random.normal(kx, (B, SEQ, N_IN), dtype=jnp.float32)
    params = init_params(kp, N_IN, N_HIDDEN, N_OUT, SEQ, NHEAD, NUM_LAYERS, DIM_FF)

    out = transformer_forward(x, params, nhead=NHEAD, num_layers=NUM_LAYERS)
    out = jax.block_until_ready(out)

    assert out.shape == (B, N_OUT)
    assert bool(jnp.all(jnp.isfinite(out)))
    # softmax rows sum to 1 (exact reciprocal in the final softmax)
    assert bool(jnp.allclose(jnp.sum(out, axis=-1), 1.0, atol=1e-4))

    # compare against a pure-JAX f32 reference (bf16 matmul operands -> ~1e-2
    # level divergence is expected and acceptable for inference)
    ref = _reference_forward(x, params, nhead=NHEAD, num_layers=NUM_LAYERS)
    max_diff = float(jnp.max(jnp.abs(out - ref)))
    assert bool(jnp.allclose(out, ref, atol=5e-2)), f"max diff {max_diff}"

    print("KERNEL_OK")
</pallas_src>

<mosaic_0001>
module attributes {stable_mosaic.version = 11 : i64} {
  func.func @_transformer_kernel(%arg0: i32, %arg1: i32, %arg2: memref<2x8x4xf32, #tpu.memory_space<vmem>>, %arg3: memref<4x128xbf16, #tpu.memory_space<vmem>>, %arg4: memref<1x128xf32, #tpu.memory_space<vmem>>, %arg5: memref<1x128x384xbf16, #tpu.memory_space<vmem>>, %arg6: memref<1x1x384xf32, #tpu.memory_space<vmem>>, %arg7: memref<1x128x128xbf16, #tpu.memory_space<vmem>>, %arg8: memref<1x1x128xf32, #tpu.memory_space<vmem>>, %arg9: memref<1x1x128xf32, #tpu.memory_space<vmem>>, %arg10: memref<1x1x128xf32, #tpu.memory_space<vmem>>, %arg11: memref<1x128x128xbf16, #tpu.memory_space<vmem>>, %arg12: memref<1x1x128xf32, #tpu.memory_space<vmem>>, %arg13: memref<1x128x128xbf16, #tpu.memory_space<vmem>>, %arg14: memref<1x1x128xf32, #tpu.memory_space<vmem>>, %arg15: memref<1x1x128xf32, #tpu.memory_space<vmem>>, %arg16: memref<1x1x128xf32, #tpu.memory_space<vmem>>, %arg17: memref<8x4xf32, #tpu.memory_space<vmem>>, %arg18: memref<1x4xf32, #tpu.memory_space<vmem>>, %arg19: memref<2x1x4xf32, #tpu.memory_space<vmem>>, %arg20: memref<2x8x128xf32, #tpu.memory_space<vmem>>) attributes {dimension_semantics = [#tpu.dimension_semantics<parallel>, #tpu.dimension_semantics<arbitrary>], iteration_bounds = array<i64: 1, 2>, scalar_prefetch = 0 : i64, scratch_operands = 1 : i64, tpu.core_type = #tpu.core_type<tc>, window_params = [{transform_indices = @transform_0, window_bounds = array<i64: 2, 8, 4>}, {pipeline_mode = #tpu.pipeline_mode<synchronous>, transform_indices = @transform_1, window_bounds = array<i64: 4, 128>}, {pipeline_mode = #tpu.pipeline_mode<synchronous>, transform_indices = @transform_2, window_bounds = array<i64: 1, 128>}, {transform_indices = @transform_3, window_bounds = array<i64: 1, 128, 384>}, {transform_indices = @transform_4, window_bounds = array<i64: 1, 1, 384>}, {transform_indices = @transform_5, window_bounds = array<i64: 1, 128, 128>}, {transform_indices = @transform_6, window_bounds = array<i64: 1, 1, 128>}, {transform_indices = @transform_7, window_bounds = array<i64: 1, 1, 128>}, {transform_indices = @transform_8, window_bounds = array<i64: 1, 1, 128>}, {transform_indices = @transform_9, window_bounds = array<i64: 1, 128, 128>}, {transform_indices = @transform_10, window_bounds = array<i64: 1, 1, 128>}, {transform_indices = @transform_11, window_bounds = array<i64: 1, 128, 128>}, {transform_indices = @transform_12, window_bounds = array<i64: 1, 1, 128>}, {transform_indices = @transform_13, window_bounds = array<i64: 1, 1, 128>}, {transform_indices = @transform_14, window_bounds = array<i64: 1, 1, 128>}, {pipeline_mode = #tpu.pipeline_mode<synchronous>, transform_indices = @transform_15, window_bounds = array<i64: 8, 4>}, {pipeline_mode = #tpu.pipeline_mode<synchronous>, transform_indices = @transform_16, window_bounds = array<i64: 1, 4>}, {transform_indices = @transform_17, window_bounds = array<i64: 2, 1, 4>}]} {
    %c0_i32 = arith.constant 0 : i32
    %0 = arith.cmpi eq, %arg1, %c0_i32 : i32
    %1 = arith.extui %0 : i1 to i32
    %c0_i32_0 = arith.constant 0 : i32
    %2 = arith.cmpi ne, %1, %c0_i32_0 : i32
    scf.if %2 {
      %c0_71 = arith.constant 0 : index
      %c0_72 = arith.constant 0 : index
      %c0_73 = arith.constant 0 : index
      %155 = vector.load %arg2[%c0_71, %c0_72, %c0_73] : memref<2x8x4xf32, #tpu.memory_space<vmem>>, vector<2x8x4xf32>
      %156 = vector.shape_cast %155 : vector<2x8x4xf32> to vector<16x4xf32>
      %157 = arith.truncf %156 : vector<16x4xf32> to vector<16x4xbf16>
      %c0_74 = arith.constant 0 : index
      %c0_75 = arith.constant 0 : index
      %158 = vector.load %arg3[%c0_74, %c0_75] : memref<4x128xbf16, #tpu.memory_space<vmem>>, vector<4x128xbf16>
      %cst_76 = arith.constant dense<0.000000e+00> : vector<16x128xf32>
      %159 = tpu.matmul %157, %158, %cst_76 {dimension_numbers = #tpu.dot_dimension_numbers<[1], [0], [0], [1], [0, 0, 1, 1], [], []>} : vector<16x4xbf16>, vector<4x128xbf16>, vector<16x128xf32> -> vector<16x128xf32>
      %c0_77 = arith.constant 0 : index
      %c0_78 = arith.constant 0 : index
      %160 = vector.load %arg4[%c0_77, %c0_78] : memref<1x128xf32, #tpu.memory_space<vmem>>, vector<1x128xf32>
      %161 = vector.broadcast %160 : vector<1x128xf32> to vector<16x128xf32>
      %162 = arith.addf %159, %161 : vector<16x128xf32>
      %163 = vector.shape_cast %162 : vector<16x128xf32> to vector<2x8x128xf32>
      %c0_79 = arith.constant 0 : index
      %c0_80 = arith.constant 0 : index
      %c0_81 = arith.constant 0 : index
      %164 = vector.load %arg20[%c0_79, %c0_80, %c0_81] : memref<2x8x128xf32, #tpu.memory_space<vmem>>, vector<2x8x128xf32>
      tpu.vector_store %arg20[%c0_79, %c0_80, %c0_81], %163 {strides = array<i32>} : memref<2x8x128xf32, #tpu.memory_space<vmem>>, vector<2x8x128xf32>,
    } else {
    }
    %c0 = arith.constant 0 : index
    %c0_1 = arith.constant 0 : index
    %c0_2 = arith.constant 0 : index
    %3 = vector.load %arg20[%c0, %c0_1, %c0_2] : memref<2x8x128xf32, #tpu.memory_space<vmem>>, vector<2x8x128xf32>
    %4 = vector.shape_cast %3 : vector<2x8x128xf32> to vector<16x128xf32>
    %5 = arith.truncf %4 : vector<16x128xf32> to vector<16x128xbf16>
    %c0_3 = arith.constant 0 : index
    %c0_4 = arith.constant 0 : index
    %c0_5 = arith.constant 0 : index
    %6 = vector.load %arg5[%c0_3, %c0_4, %c0_5] : memref<1x128x384xbf16, #tpu.memory_space<vmem>>, vector<1x128x384xbf16>
    %7 = vector.shape_cast %6 : vector<1x128x384xbf16> to vector<128x384xbf16>
    %cst = arith.constant dense<0.000000e+00> : vector<16x384xf32>
    %8 = tpu.matmul %5, %7, %cst {dimension_numbers = #tpu.dot_dimension_numbers<[1], [0], [0], [1], [0, 0, 1, 1], [], []>} : vector<16x128xbf16>, vector<128x384xbf16>, vector<16x384xf32> -> vector<16x384xf32>
    %c0_6 = arith.constant 0 : index
    %c0_7 = arith.constant 0 : index
    %c0_8 = arith.constant 0 : index
    %9 = vector.load %arg6[%c0_6, %c0_7, %c0_8] : memref<1x1x384xf32, #tpu.memory_space<vmem>>, vector<1x1x384xf32>
    %10 = vector.shape_cast %9 : vector<1x1x384xf32> to vector<1x384xf32>
    %11 = vector.broadcast %10 : vector<1x384xf32> to vector<16x384xf32>
    %12 = arith.addf %8, %11 : vector<16x384xf32>
    %13 = vector.extract_strided_slice %12 {offsets = [0, 0], sizes = [16, 128], strides = [1, 1]} : vector<16x384xf32> to vector<16x128xf32>
    %14 = vector.shape_cast %13 : vector<16x128xf32> to vector<2x8x128xf32>
    %15 = vector.extract_strided_slice %12 {offsets = [0, 128], sizes = [16, 128], strides = [1, 1]} : vector<16x384xf32> to vector<16x128xf32>
    %16 = vector.shape_cast %15 : vector<16x128xf32> to vector<2x8x128xf32>
    %17 = vector.extract_strided_slice %12 {offsets = [0, 256], sizes = [16, 128], strides = [1, 1]} : vector<16x384xf32> to vector<16x128xf32>
    %18 = vector.shape_cast %17 : vector<16x128xf32> to vector<2x8x128xf32>
    %cst_9 = arith.constant 0.000000e+00 : f32
    %19 = vector.broadcast %cst_9 : f32 to vector<16x128xf32>
    %20 = vector.extract_strided_slice %14 {offsets = [0, 0, 0], sizes = [2, 8, 16], strides = [1, 1, 1]} : vector<2x8x128xf32> to vector<2x8x16xf32>
    %21 = arith.truncf %20 : vector<2x8x16xf32> to vector<2x8x16xbf16>
    %22 = vector.extract_strided_slice %16 {offsets = [0, 0, 0], sizes = [2, 8, 16], strides = [1, 1, 1]} : vector<2x8x128xf32> to vector<2x8x16xf32>
    %23 = arith.truncf %22 : vector<2x8x16xf32> to vector<2x8x16xbf16>
    %24 = vector.extract_strided_slice %18 {offsets = [0, 0, 0], sizes = [2, 8, 16], strides = [1, 1, 1]} : vector<2x8x128xf32> to vector<2x8x16xf32>
    %25 = arith.truncf %24 : vector<2x8x16xf32> to vector<2x8x16xbf16>
    "tpu.trace_start"() <{level = 10 : i32, message = "bqd,bkd->bqk"}> : () -> ()
    %cst_10 = arith.constant dense<0.000000e+00> : vector<2x8x8xf32>
    %26 = tpu.matmul %21, %23, %cst_10 {dimension_numbers = #tpu.dot_dimension_numbers<[2], [2], [1], [1], [0, 0, 0, 1, 1, 1], [0], [0]>} : vector<2x8x16xbf16>, vector<2x8x16xbf16>, vector<2x8x8xf32> -> vector<2x8x8xf32>
    "tpu.trace_stop"() : () -> ()
    %cst_11 = arith.constant dense<0xFF800000> : vector<2x8xf32>
    %27 = vector.multi_reduction <maximumf>, %26, %cst_11 [2] : vector<2x8x8xf32> to vector<2x8xf32>
    %28 = vector.shape_cast %27 : vector<2x8xf32> to vector<2x8x1xf32>
    %29 = vector.broadcast %28 : vector<2x8x1xf32> to vector<2x8x8xf32>
    %30 = arith.subf %26, %29 : vector<2x8x8xf32>
    %31 = math.exp %30 : vector<2x8x8xf32>
    %cst_12 = arith.constant dense<0.000000e+00> : vector<2x8xf32>
    %32 = vector.multi_reduction <add>, %31, %cst_12 [2] : vector<2x8x8xf32> to vector<2x8xf32>
    %33 = vector.shape_cast %32 : vector<2x8xf32> to vector<2x8x1xf32>
    %34 = tpu.reciprocal %33 {approx = true} : vector<2x8x1xf32> -> vector<2x8x1xf32>
    %35 = vector.broadcast %34 : vector<2x8x1xf32> to vector<2x8x8xf32>
    %36 = arith.mulf %31, %35 : vector<2x8x8xf32>
    %37 = arith.truncf %36 : vector<2x8x8xf32> to vector<2x8x8xbf16>
    "tpu.trace_start"() <{level = 10 : i32, message = "bqk,bkd->bqd"}> : () -> ()
    %cst_13 = arith.constant dense<0.000000e+00> : vector<2x8x16xf32>
    %38 = tpu.matmul %37, %25, %cst_13 {dimension_numbers = #tpu.dot_dimension_numbers<[2], [1], [1], [2], [0, 0, 0, 1, 1, 2], [0], [0]>} : vector<2x8x8xbf16>, vector<2x8x16xbf16>, vector<2x8x16xf32> -> vector<2x8x16xf32>
    "tpu.trace_stop"() : () -> ()
    %39 = vector.shape_cast %38 : vector<2x8x16xf32> to vector<16x16xf32>
    %40 = arith.truncf %39 : vector<16x16xf32> to vector<16x16xbf16>
    %c0_14 = arith.constant 0 : index
    %c0_15 = arith.constant 0 : index
    %c0_16 = arith.constant 0 : index
    %41 = vector.load %arg7[%c0_14, %c0_15, %c0_16] : memref<1x128x128xbf16, #tpu.memory_space<vmem>>, vector<1x16x128xbf16>
    %42 = vector.shape_cast %41 : vector<1x16x128xbf16> to vector<16x128xbf16>
    %cst_17 = arith.constant dense<0.000000e+00> : vector<16x128xf32>
    %43 = tpu.matmul %40, %42, %cst_17 {dimension_numbers = #tpu.dot_dimension_numbers<[1], [0], [0], [1], [0, 0, 1, 1], [], []>} : vector<16x16xbf16>, vector<16x128xbf16>, vector<16x128xf32> -> vector<16x128xf32>
    %44 = arith.addf %19, %43 : vector<16x128xf32>
    %45 = vector.extract_strided_slice %14 {offsets = [0, 0, 16], sizes = [2, 8, 16], strides = [1, 1, 1]} : vector<2x8x128xf32> to vector<2x8x16xf32>
    %46 = arith.truncf %45 : vector<2x8x16xf32> to vector<2x8x16xbf16>
    %47 = vector.extract_strided_slice %16 {offsets = [0, 0, 16], sizes = [2, 8, 16], strides = [1, 1, 1]} : vector<2x8x128xf32> to vector<2x8x16xf32>
    %48 = arith.truncf %47 : vector<2x8x16xf32> to vector<2x8x16xbf16>
    %49 = vector.extract_strided_slice %18 {offsets = [0, 0, 16], sizes = [2, 8, 16], strides = [1, 1, 1]} : vector<2x8x128xf32> to vector<2x8x16xf32>
    %50 = arith.truncf %49 : vector<2x8x16xf32> to vector<2x8x16xbf16>
    "tpu.trace_start"() <{level = 10 : i32, message = "bqd,bkd->bqk"}> : () -> ()
    %cst_18 = arith.constant dense<0.000000e+00> : vector<2x8x8xf32>
    %51 = tpu.matmul %46, %48, %cst_18 {dimension_numbers = #tpu.dot_dimension_numbers<[2], [2], [1], [1], [0, 0, 0, 1, 1, 1], [0], [0]>} : vector<2x8x16xbf16>, vector<2x8x16xbf16>, vector<2x8x8xf32> -> vector<2x8x8xf32>
    "tpu.trace_stop"() : () -> ()
    %cst_19 = arith.constant dense<0xFF800000> : vector<2x8xf32>
    %52 = vector.multi_reduction <maximumf>, %51, %cst_19 [2] : vector<2x8x8xf32> to vector<2x8xf32>
    %53 = vector.shape_cast %52 : vector<2x8xf32> to vector<2x8x1xf32>
    %54 = vector.broadcast %53 : vector<2x8x1xf32> to vector<2x8x8xf32>
    %55 = arith.subf %51, %54 : vector<2x8x8xf32>
    %56 = math.exp %55 : vector<2x8x8xf32>
    %cst_20 = arith.constant dense<0.000000e+00> : vector<2x8xf32>
    %57 = vector.multi_reduction <add>, %56, %cst_20 [2] : vector<2x8x8xf32> to vector<2x8xf32>
    %58 = vector.shape_cast %57 : vector<2x8xf32> to vector<2x8x1xf32>
    %59 = tpu.reciprocal %58 {approx = true} : vector<2x8x1xf32> -> vector<2x8x1xf32>
    %60 = vector.broadcast %59 : vector<2x8x1xf32> to vector<2x8x8xf32>
    %61 = arith.mulf %56, %60 : vector<2x8x8xf32>
    %62 = arith.truncf %61 : vector<2x8x8xf32> to vector<2x8x8xbf16>
    "tpu.trace_start"() <{level = 10 : i32, message = "bqk,bkd->bqd"}> : () -> ()
    %cst_21 = arith.constant dense<0.000000e+00> : vector<2x8x16xf32>
    %63 = tpu.matmul %62, %50, %cst_21 {dimension_numbers = #tpu.dot_dimension_numbers<[2], [1], [1], [2], [0, 0, 0, 1, 1, 2], [0], [0]>} : vector<2x8x8xbf16>, vector<2x8x16xbf16>, vector<2x8x16xf32> -> vector<2x8x16xf32>
    "tpu.trace_stop"() : () -> ()
    %64 = vector.shape_cast %63 : vector<2x8x16xf32> to vector<16x16xf32>
    %65 = arith.truncf %64 : vector<16x16xf32> to vector<16x16xbf16>
    %c0_22 = arith.constant 0 : index
    %c16 = arith.constant 16 : index
    %c0_23 = arith.constant 0 : index
    %66 = vector.load %arg7[%c0_22, %c16, %c0_23] : memref<1x128x128xbf16, #tpu.memory_space<vmem>>, vector<1x16x128xbf16>
    %67 = vector.shape_cast %66 : vector<1x16x128xbf16> to vector<16x128xbf16>
    %cst_24 = arith.constant dense<0.000000e+00> : vector<16x128xf32>
    %68 = tpu.matmul %65, %67, %cst_24 {dimension_numbers = #tpu.dot_dimension_numbers<[1], [0], [0], [1], [0, 0, 1, 1], [], []>} : vector<16x16xbf16>, vector<16x128xbf16>, vector<16x128xf32> -> vector<16x128xf32>
    %69 = arith.addf %44, %68 : vector<16x128xf32>
    %c0_25 = arith.constant 0 : index
    %c0_26 = arith.constant 0 : index
    %c0_27 = arith.constant 0 : index
    %70 = vector.load %arg8[%c0_25, %c0_26, %c0_27] : memref<1x1x128xf32, #tpu.memory_space<vmem>>, vector<1x1x128xf32>
    %71 = vector.shape_cast %70 : vector<1x1x128xf32> to vector<1x128xf32>
    %72 = vector.broadcast %71 : vector<1x128xf32> to vector<16x128xf32>
    %73 = arith.addf %69, %72 : vector<16x128xf32>
    %74 = arith.addf %4, %73 : vector<16x128xf32>
    %c0_28 = arith.constant 0 : index
    %c0_29 = arith.constant 0 : index
    %c0_30 = arith.constant 0 : index
    %75 = vector.load %arg9[%c0_28, %c0_29, %c0_30] : memref<1x1x128xf32, #tpu.memory_space<vmem>>, vector<1x1x128xf32>
    %76 = vector.shape_cast %75 : vector<1x1x128xf32> to vector<1x128xf32>
    %c0_31 = arith.constant 0 : index
    %c0_32 = arith.constant 0 : index
    %c0_33 = arith.constant 0 : index
    %77 = vector.load %arg10[%c0_31, %c0_32, %c0_33] : memref<1x1x128xf32, #tpu.memory_space<vmem>>, vector<1x1x128xf32>
    %78 = vector.shape_cast %77 : vector<1x1x128xf32> to vector<1x128xf32>
    %cst_34 = arith.constant dense<0.000000e+00> : vector<16xf32>
    %79 = vector.multi_reduction <add>, %74, %cst_34 [1] : vector<16x128xf32> to vector<16xf32>
    %80 = vector.shape_cast %79 : vector<16xf32> to vector<16x1xf32>
    %cst_35 = arith.constant 3.125000e-02 : f32
    %81 = vector.broadcast %cst_35 : f32 to vector<16x1xf32>
    %82 = arith.mulf %80, %81 : vector<16x1xf32>
    %83 = arith.mulf %74, %74 : vector<16x128xf32>
    %cst_36 = arith.constant dense<0.000000e+00> : vector<16xf32>
    %84 = vector.multi_reduction <add>, %83, %cst_36 [1] : vector<16x128xf32> to vector<16xf32>
    %85 = vector.shape_cast %84 : vector<16xf32> to vector<16x1xf32>
    %cst_37 = arith.constant 3.125000e-02 : f32
    %86 = vector.broadcast %cst_37 : f32 to vector<16x1xf32>
    %87 = arith.mulf %85, %86 : vector<16x1xf32>
    %88 = arith.mulf %82, %82 : vector<16x1xf32>
    %89 = arith.subf %87, %88 : vector<16x1xf32>
    %cst_38 = arith.constant 0.000000e+00 : f32
    %90 = vector.broadcast %cst_38 : f32 to vector<16x1xf32>
    %91 = arith.maximumf %89, %90 : vector<16x1xf32>
    %92 = vector.broadcast %82 : vector<16x1xf32> to vector<16x128xf32>
    %93 = arith.subf %74, %92 : vector<16x128xf32>
    %cst_39 = arith.constant 9.99999974E-6 : f32
    %94 = vector.broadcast %cst_39 : f32 to vector<16x1xf32>
    %95 = arith.addf %91, %94 : vector<16x1xf32>
    %96 = math.rsqrt %95 : vector<16x1xf32>
    %97 = vector.broadcast %96 : vector<16x1xf32> to vector<16x128xf32>
    %98 = arith.mulf %93, %97 : vector<16x128xf32>
    %99 = vector.broadcast %76 : vector<1x128xf32> to vector<16x128xf32>
    %100 = arith.mulf %98, %99 : vector<16x128xf32>
    %101 = vector.broadcast %78 : vector<1x128xf32> to vector<16x128xf32>
    %102 = arith.addf %100, %101 : vector<16x128xf32>
    %103 = arith.truncf %102 : vector<16x128xf32> to vector<16x128xbf16>
    %c0_40 = arith.constant 0 : index
    %c0_41 = arith.constant 0 : index
    %c0_42 = arith.constant 0 : index
    %104 = vector.load %arg11[%c0_40, %c0_41, %c0_42] : memref<1x128x128xbf16, #tpu.memory_space<vmem>>, vector<1x128x128xbf16>
    %105 = vector.shape_cast %104 : vector<1x128x128xbf16> to vector<128x128xbf16>
    %cst_43 = arith.constant dense<0.000000e+00> : vector<16x128xf32>
    %106 = tpu.matmul %103, %105, %cst_43 {dimension_numbers = #tpu.dot_dimension_numbers<[1], [0], [0], [1], [0, 0, 1, 1], [], []>} : vector<16x128xbf16>, vector<128x128xbf16>, vector<16x128xf32> -> vector<16x128xf32>
    %c0_44 = arith.constant 0 : index
    %c0_45 = arith.constant 0 : index
    %c0_46 = arith.constant 0 : index
    %107 = vector.load %arg12[%c0_44, %c0_45, %c0_46] : memref<1x1x128xf32, #tpu.memory_space<vmem>>, vector<1x1x128xf32>
    %108 = vector.shape_cast %107 : vector<1x1x128xf32> to vector<1x128xf32>
    %109 = vector.broadcast %108 : vector<1x128xf32> to vector<16x128xf32>
    %110 = arith.addf %106, %109 : vector<16x128xf32>
    %cst_47 = arith.constant 0.000000e+00 : f32
    %111 = vector.broadcast %cst_47 : f32 to vector<16x128xf32>
    %112 = arith.maximumf %110, %111 : vector<16x128xf32>
    %113 = arith.truncf %112 : vector<16x128xf32> to vector<16x128xbf16>
    %c0_48 = arith.constant 0 : index
    %c0_49 = arith.constant 0 : index
    %c0_50 = arith.constant 0 : index
    %114 = vector.load %arg13[%c0_48, %c0_49, %c0_50] : memref<1x128x128xbf16, #tpu.memory_space<vmem>>, vector<1x128x128xbf16>
    %115 = vector.shape_cast %114 : vector<1x128x128xbf16> to vector<128x128xbf16>
    %cst_51 = arith.constant dense<0.000000e+00> : vector<16x128xf32>
    %116 = tpu.matmul %113, %115, %cst_51 {dimension_numbers = #tpu.dot_dimension_numbers<[1], [0], [0], [1], [0, 0, 1, 1], [], []>} : vector<16x128xbf16>, vector<128x128xbf16>, vector<16x128xf32> -> vector<16x128xf32>
    %c0_52 = arith.constant 0 : index
    %c0_53 = arith.constant 0 : index
    %c0_54 = arith.constant 0 : index
    %117 = vector.load %arg14[%c0_52, %c0_53, %c0_54] : memref<1x1x128xf32, #tpu.memory_space<vmem>>, vector<1x1x128xf32>
    %118 = vector.shape_cast %117 : vector<1x1x128xf32> to vector<1x128xf32>
    %119 = vector.broadcast %118 : vector<1x128xf32> to vector<16x128xf32>
    %120 = arith.addf %116, %119 : vector<16x128xf32>
    %121 = arith.addf %102, %120 : vector<16x128xf32>
    %c0_55 = arith.constant 0 : index
    %c0_56 = arith.constant 0 : index
    %c0_57 = arith.constant 0 : index
    %122 = vector.load %arg15[%c0_55, %c0_56, %c0_57] : memref<1x1x128xf32, #tpu.memory_space<vmem>>, vector<1x1x128xf32>
    %123 = vector.shape_cast %122 : vector<1x1x128xf32> to vector<1x128xf32>
    %c0_58 = arith.constant 0 : index
    %c0_59 = arith.constant 0 : index
    %c0_60 = arith.constant 0 : index
    %124 = vector.load %arg16[%c0_58, %c0_59, %c0_60] : memref<1x1x128xf32, #tpu.memory_space<vmem>>, vector<1x1x128xf32>
    %125 = vector.shape_cast %124 : vector<1x1x128xf32> to vector<1x128xf32>
    %cst_61 = arith.constant dense<0.000000e+00> : vector<16xf32>
    %126 = vector.multi_reduction <add>, %121, %cst_61 [1] : vector<16x128xf32> to vector<16xf32>
    %127 = vector.shape_cast %126 : vector<16xf32> to vector<16x1xf32>
    %cst_62 = arith.constant 3.125000e-02 : f32
    %128 = vector.broadcast %cst_62 : f32 to vector<16x1xf32>
    %129 = arith.mulf %127, %128 : vector<16x1xf32>
    %130 = arith.mulf %121, %121 : vector<16x128xf32>
    %cst_63 = arith.constant dense<0.000000e+00> : vector<16xf32>
    %131 = vector.multi_reduction <add>, %130, %cst_63 [1] : vector<16x128xf32> to vector<16xf32>
    %132 = vector.shape_cast %131 : vector<16xf32> to vector<16x1xf32>
    %cst_64 = arith.constant 3.125000e-02 : f32
    %133 = vector.broadcast %cst_64 : f32 to vector<16x1xf32>
    %134 = arith.mulf %132, %133 : vector<16x1xf32>
    %135 = arith.mulf %129, %129 : vector<16x1xf32>
    %136 = arith.subf %134, %135 : vector<16x1xf32>
    %cst_65 = arith.constant 0.000000e+00 : f32
    %137 = vector.broadcast %cst_65 : f32 to vector<16x1xf32>
    %138 = arith.maximumf %136, %137 : vector<16x1xf32>
    %139 = vector.broadcast %129 : vector<16x1xf32> to vector<16x128xf32>
    %140 = arith.subf %121, %139 : vector<16x128xf32>
    %cst_66 = arith.constant 9.99999974E-6 : f32
    %141 = vector.broadcast %cst_66 : f32 to vector<16x1xf32>
    %142 = arith.addf %138, %141 : vector<16x1xf32>
    %143 = math.rsqrt %142 : vector<16x1xf32>
    %144 = vector.broadcast %143 : vector<16x1xf32> to vector<16x128xf32>
    %145 = arith.mulf %140, %144 : vector<16x128xf32>
    %146 = vector.broadcast %123 : vector<1x128xf32> to vector<16x128xf32>
    %147 = arith.mulf %145, %146 : vector<16x128xf32>
    %148 = vector.broadcast %125 : vector<1x128xf32> to vector<16x128xf32>
    %149 = arith.addf %147, %148 : vector<16x128xf32>
    %150 = vector.shape_cast %149 : vector<16x128xf32> to vector<2x8x128xf32>
    %c0_67 = arith.constant 0 : index
    %c0_68 = arith.constant 0 : index
    %c0_69 = arith.constant 0 : index
    %151 = vector.load %arg20[%c0_67, %c0_68, %c0_69] : memref<2x8x128xf32, #tpu.memory_space<vmem>>, vector<2x8x128xf32>
    tpu.vector_store %arg20[%c0_67, %c0_68, %c0_69], %150 {strides = array<i32>} : memref<2x8x128xf32, #tpu.memory_space<vmem>>, vector<2x8x128xf32>,
    %c1_i32 = arith.constant 1 : i32
    %152 = arith.cmpi eq, %arg1, %c1_i32 : i32
    %153 = arith.extui %152 : i1 to i32
    %c0_i32_70 = arith.constant 0 : i32
    %154 = arith.cmpi ne, %153, %c0_i32_70 : i32
    scf.if %154 {
      %155 = vector.shape_cast %149 : vector<16x128xf32> to vector<2x8x128xf32>
      %cst_71 = arith.constant dense<0.000000e+00> : vector<2x8xf32>
      %156 = vector.multi_reduction <add>, %155, %cst_71 [2] : vector<2x8x128xf32> to vector<2x8xf32>
      %cst_72 = arith.constant 3.125000e-02 : f32
      %157 = vector.broadcast %cst_72 : f32 to vector<2x8xf32>
      %158 = arith.mulf %156, %157 : vector<2x8xf32>
      %c0_73 = arith.constant 0 : index
      %c0_74 = arith.constant 0 : index
      %159 = vector.load %arg17[%c0_73, %c0_74] : memref<8x4xf32, #tpu.memory_space<vmem>>, vector<8x4xf32>
      %cst_75 = arith.constant dense<0.000000e+00> : vector<2x4xf32>
      %160 = tpu.matmul %158, %159, %cst_75 {dimension_numbers = #tpu.dot_dimension_numbers<[1], [0], [0], [1], [0, 0, 1, 1], [], []>} : vector<2x8xf32>, vector<8x4xf32>, vector<2x4xf32> -> vector<2x4xf32>
      %c0_76 = arith.constant 0 : index
      %c0_77 = arith.constant 0 : index
      %161 = vector.load %arg18[%c0_76, %c0_77] : memref<1x4xf32, #tpu.memory_space<vmem>>, vector<1x4xf32>
      %162 = vector.broadcast %161 : vector<1x4xf32> to vector<2x4xf32>
      %163 = arith.addf %160, %162 : vector<2x4xf32>
      %cst_78 = arith.constant dense<0xFF800000> : vector<2xf32>
      %164 = vector.multi_reduction <maximumf>, %163, %cst_78 [1] : vector<2x4xf32> to vector<2xf32>
      %165 = vector.shape_cast %164 : vector<2xf32> to vector<2x1xf32>
      %166 = vector.broadcast %165 : vector<2x1xf32> to vector<2x4xf32>
      %167 = arith.subf %163, %166 : vector<2x4xf32>
      %168 = math.exp %167 : vector<2x4xf32>
      %cst_79 = arith.constant dense<0.000000e+00> : vector<2xf32>
      %169 = vector.multi_reduction <add>, %168, %cst_79 [1] : vector<2x4xf32> to vector<2xf32>
      %170 = vector.shape_cast %169 : vector<2xf32> to vector<2x1xf32>
      %171 = tpu.reciprocal %170 : vector<2x1xf32> -> vector<2x1xf32>
      %172 = vector.broadcast %171 : vector<2x1xf32> to vector<2x4xf32>
      %173 = arith.mulf %168, %172 : vector<2x4xf32>
      %174 = vector.shape_cast %173 : vector<2x4xf32> to vector<2x1x4xf32>
      %c0_80 = arith.constant 0 : index
      %c0_81 = arith.constant 0 : index
      %c0_82 = arith.constant 0 : index
      %175 = vector.load %arg19[%c0_80, %c0_81, %c0_82] : memref<2x1x4xf32, #tpu.memory_space<vmem>>, vector<2x1x4xf32>
      tpu.vector_store %arg19[%c0_80, %c0_81, %c0_82], %174 {strides = array<i32>} : memref<2x1x4xf32, #tpu.memory_space<vmem>>, vector<2x1x4xf32>,
    } else {
    }
    return
  }
  func.func @transform_0(%arg0: i32, %arg1: i32) -> (i32, i32, i32) {
    %c0_i32 = arith.constant 0 : i32
    %c0_i32_0 = arith.constant 0 : i32
    %c0_i32_1 = arith.constant 0 : i32
    return %arg0, %c0_i32, %c0_i32_0 : i32, i32, i32
  }
  func.func @transform_1(%arg0: i32, %arg1: i32) -> (i32, i32) {
    %c0_i32 = arith.constant 0 : i32
    %c0_i32_0 = arith.constant 0 : i32
    %c0_i32_1 = arith.constant 0 : i32
    return %c0_i32, %c0_i32_0 : i32, i32
  }
  func.func @transform_2(%arg0: i32, %arg1: i32) -> (i32, i32) {
    %c0_i32 = arith.constant 0 : i32
    %c0_i32_0 = arith.constant 0 : i32
    %c0_i32_1 = arith.constant 0 : i32
    return %c0_i32, %c0_i32_0 : i32, i32
  }
  func.func @transform_3(%arg0: i32, %arg1: i32) -> (i32, i32, i32) {
    %c0_i32 = arith.constant 0 : i32
    %c0_i32_0 = arith.constant 0 : i32
    %c0_i32_1 = arith.constant 0 : i32
    return %arg1, %c0_i32, %c0_i32_0 : i32, i32, i32
  }
  func.func @transform_4(%arg0: i32, %arg1: i32) -> (i32, i32, i32) {
    %c0_i32 = arith.constant 0 : i32
    %c0_i32_0 = arith.constant 0 : i32
    %c0_i32_1 = arith.constant 0 : i32
    return %arg1, %c0_i32, %c0_i32_0 : i32, i32, i32
  }
  func.func @transform_5(%arg0: i32, %arg1: i32) -> (i32, i32, i32) {
    %c0_i32 = arith.constant 0 : i32
    %c0_i32_0 = arith.constant 0 : i32
    %c0_i32_1 = arith.constant 0 : i32
    return %arg1, %c0_i32, %c0_i32_0 : i32, i32, i32
  }
  func.func @transform_6(%arg0: i32, %arg1: i32) -> (i32, i32, i32) {
    %c0_i32 = arith.constant 0 : i32
    %c0_i32_0 = arith.constant 0 : i32
    %c0_i32_1 = arith.constant 0 : i32
    return %arg1, %c0_i32, %c0_i32_0 : i32, i32, i32
  }
  func.func @transform_7(%arg0: i32, %arg1: i32) -> (i32, i32, i32) {
    %c0_i32 = arith.constant 0 : i32
    %c0_i32_0 = arith.constant 0 : i32
    %c0_i32_1 = arith.constant 0 : i32
    return %arg1, %c0_i32, %c0_i32_0 : i32, i32, i32
  }
  func.func @transform_8(%arg0: i32, %arg1: i32) -> (i32, i32, i32) {
    %c0_i32 = arith.constant 0 : i32
    %c0_i32_0 = arith.constant 0 : i32
    %c0_i32_1 = arith.constant 0 : i32
    return %arg1, %c0_i32, %c0_i32_0 : i32, i32, i32
  }
  func.func @transform_9(%arg0: i32, %arg1: i32) -> (i32, i32, i32) {
    %c0_i32 = arith.constant 0 : i32
    %c0_i32_0 = arith.constant 0 : i32
    %c0_i32_1 = arith.constant 0 : i32
    return %arg1, %c0_i32, %c0_i32_0 : i32, i32, i32
  }
  func.func @transform_10(%arg0: i32, %arg1: i32) -> (i32, i32, i32) {
    %c0_i32 = arith.constant 0 : i32
    %c0_i32_0 = arith.constant 0 : i32
    %c0_i32_1 = arith.constant 0 : i32
    return %arg1, %c0_i32, %c0_i32_0 : i32, i32, i32
  }
  func.func @transform_11(%arg0: i32, %arg1: i32) -> (i32, i32, i32) {
    %c0_i32 = arith.constant 0 : i32
    %c0_i32_0 = arith.constant 0 : i32
    %c0_i32_1 = arith.constant 0 : i32
    return %arg1, %c0_i32, %c0_i32_0 : i32, i32, i32
  }
  func.func @transform_12(%arg0: i32, %arg1: i32) -> (i32, i32, i32) {
    %c0_i32 = arith.constant 0 : i32
    %c0_i32_0 = arith.constant 0 : i32
    %c0_i32_1 = arith.constant 0 : i32
    return %arg1, %c0_i32, %c0_i32_0 : i32, i32, i32
  }
  func.func @transform_13(%arg0: i32, %arg1: i32) -> (i32, i32, i32) {
    %c0_i32 = arith.constant 0 : i32
    %c0_i32_0 = arith.constant 0 : i32
    %c0_i32_1 = arith.constant 0 : i32
    return %arg1, %c0_i32, %c0_i32_0 : i32, i32, i32
  }
  func.func @transform_14(%arg0: i32, %arg1: i32) -> (i32, i32, i32) {
    %c0_i32 = arith.constant 0 : i32
    %c0_i32_0 = arith.constant 0 : i32
    %c0_i32_1 = arith.constant 0 : i32
    return %arg1, %c0_i32, %c0_i32_0 : i32, i32, i32
  }
  func.func @transform_15(%arg0: i32, %arg1: i32) -> (i32, i32) {
    %c0_i32 = arith.constant 0 : i32
    %c0_i32_0 = arith.constant 0 : i32
    %c0_i32_1 = arith.constant 0 : i32
    return %c0_i32, %c0_i32_0 : i32, i32
  }
  func.func @transform_16(%arg0: i32, %arg1: i32) -> (i32, i32) {
    %c0_i32 = arith.constant 0 : i32
    %c0_i32_0 = arith.constant 0 : i32
    %c0_i32_1 = arith.constant 0 : i32
    return %c0_i32, %c0_i32_0 : i32, i32
  }
  func.func @transform_17(%arg0: i32, %arg1: i32) -> (i32, i32, i32) {
    %c0_i32 = arith.constant 0 : i32
    %c0_i32_0 = arith.constant 0 : i32
    %c0_i32_1 = arith.constant 0 : i32
    return %arg0, %c0_i32, %c0_i32_0 : i32, i32, i32
  }
}

</mosaic_0001>

<llo_original>
// kernel: transformer_forward.1
$region0: #{transformer_forward.1}
  #allocation0 [shape = 'u32[]', space=smem, size = 0x4, offset = 0x4, fixed_abs, tag = 'smem constant byte address 0x4 - core index']
  #allocation1 [shape = 'u32[144,128]{1,0:T(1,128)}', space=vmem, size = 0x12000, scoped, tag = 'internal scratch']
  #allocation2 [shape = 'f32[2,8,128]{2,1,0:T(8,128)}', space=vmem, size = 0x2000, scoped, tag = 'scratch operand']
  %s0 = inlined_call_operand.vmem [shape: f32[2,8,4], index: 0, kind: input, shape index: {}]
  %s1 = inlined_call_operand.vmem [shape: bf16[4,128], index: 1, kind: input, shape index: {}]
  %s2 = inlined_call_operand.vmem [shape: f32[1,128], index: 2, kind: input, shape index: {}]
  %s3 = inlined_call_operand.vmem [shape: bf16[2,128,384], index: 3, kind: input, shape index: {}]
  %s4 = inlined_call_operand.vmem [shape: f32[2,1,384], index: 4, kind: input, shape index: {}]
  %s5 = inlined_call_operand.vmem [shape: bf16[2,128,128], index: 5, kind: input, shape index: {}]
  %s6 = inlined_call_operand.vmem [shape: f32[2,1,128], index: 6, kind: input, shape index: {}]
  %s7 = inlined_call_operand.vmem [shape: f32[2,1,128], index: 7, kind: input, shape index: {}]
  %s8 = inlined_call_operand.vmem [shape: f32[2,1,128], index: 8, kind: input, shape index: {}]
  %s9 = inlined_call_operand.vmem [shape: bf16[2,128,128], index: 9, kind: input, shape index: {}]
  %s10 = inlined_call_operand.vmem [shape: f32[2,1,128], index: 10, kind: input, shape index: {}]
  %s11 = inlined_call_operand.vmem [shape: bf16[2,128,128], index: 11, kind: input, shape index: {}]
  %s12 = inlined_call_operand.vmem [shape: f32[2,1,128], index: 12, kind: input, shape index: {}]
  %s13 = inlined_call_operand.vmem [shape: f32[2,1,128], index: 13, kind: input, shape index: {}]
  %s14 = inlined_call_operand.vmem [shape: f32[2,1,128], index: 14, kind: input, shape index: {}]
  %s15 = inlined_call_operand.vmem [shape: f32[8,4], index: 15, kind: input, shape index: {}]
  %s16 = inlined_call_operand.vmem [shape: f32[1,4], index: 16, kind: input, shape index: {}]
  %s17 = inlined_call_operand.hbm [shape: f32[2,1,4], index: 17, kind: output, shape index: {}]
  %s18 = sld [smem:[#allocation0]]
  $region109: #{transformer_forward.1} parent=0
    _
  %s20 = ssub.s32 1, %s18
  %s21 = scalar_select 0, %s20, %s18
  $region1: #{transformer_forward.1} parent=0
    #allocation3 [shape = 'u8[1024]{0}', space=vmem, size = 0x400, scoped, tag = 'output window, operand 0, single buffered']
    #allocation4 [shape = 's32[2]{0}', space=sflag, size = 0x8, scoped, tag = 'scoped memory for transformer_forward.1']
    %22 = vsyncpa [#allocation4], 0
    loop: start=0, step=1, limit=4
    $region2: #{transformer_forward.1} parent=1 // loop_pre_header
      _
    $region3: #{transformer_forward.1} parent=1 // loop_header
      %s24 = sphi 0, %s28
      %p25 = scmp.ge.s32.totalorder %s24, 4
      %s31 = sphi 0, %s43
      %s32 = sphi 0, %s39
      %s33 = sphi 0, %s31
      %s34 = sphi 0, %s32
      %s35 = sphi 0, %s33
      %s36 = sphi 0, %s34
      %s46 = sphi 0, %s48
      %s49 = sphi 0, %s46
      %s50 = sphi 0, %s49
      %s66 = sphi 0, %s50
      %s70 = sphi 0, %s70
      %s72 = sphi 0, %s70
      %s73 = sphi 0, %s72
      %s87 = sphi 0, %s73
      %s91 = sphi 0, %s91
      %s93 = sphi 0, %s91
      %s94 = sphi 0, %s93
      %s108 = sphi 0, %s94
      %s114 = sphi 0, %s116
      %s117 = sphi 0, %s114
      %s118 = sphi 0, %s117
      %s134 = sphi 0, %s118
      %s140 = sphi 0, %s142
      %s143 = sphi 0, %s140
      %s144 = sphi 0, %s143
      %s160 = sphi 0, %s144
      %s166 = sphi 0, %s168
      %s169 = sphi 0, %s166
      %s170 = sphi 0, %s169
      %s186 = sphi 0, %s170
      %s192 = sphi 0, %s194
      %s195 = sphi 0, %s192
      %s196 = sphi 0, %s195
      %s212 = sphi 0, %s196
      %s218 = sphi 0, %s220
      %s221 = sphi 0, %s218
      %s222 = sphi 0, %s221
      %s238 = sphi 0, %s222
      %s244 = sphi 0, %s246
      %s247 = sphi 0, %s244
      %s248 = sphi 0, %s247
      %s264 = sphi 0, %s248
      %s270 = sphi 0, %s272
      %s273 = sphi 0, %s270
      %s274 = sphi 0, %s273
      %s290 = sphi 0, %s274
      %s296 = sphi 0, %s298
      %s299 = sphi 0, %s296
      %s300 = sphi 0, %s299
      %s316 = sphi 0, %s300
      %s322 = sphi 0, %s324
      %s325 = sphi 0, %s322
      %s326 = sphi 0, %s325
      %s342 = sphi 0, %s326
      %s348 = sphi 0, %s350
      %s351 = sphi 0, %s348
      %s352 = sphi 0, %s351
      %s368 = sphi 0, %s352
      %s374 = sphi 0, %s376
      %s377 = sphi 0, %s374
      %s378 = sphi 0, %s377
      %s394 = sphi 0, %s378
      %s400 = sphi 0, %s402
      %s403 = sphi 0, %s400
      %s404 = sphi 0, %s403
      %s420 = sphi 0, %s404
      %s424 = sphi 0, %s424
      %s426 = sphi 0, %s424
      %s427 = sphi 0, %s426
      %s441 = sphi 0, %s427
      %s445 = sphi 0, %s445
      %s447 = sphi 0, %s445
      %s448 = sphi 0, %s447
      %s462 = sphi 0, %s448
      %s468 = sphi 0, %s470
      %s471 = sphi 0, %s468
      %s472 = sphi 0, %s471
      %s488 = sphi 0, %s472
    $region4: #{transformer_forward.1} parent=1 // loop_header_branch
      %27 = sbr.rel (%p25) target = $region8
    $region5: #{transformer_forward.1} parent=1 // loop_body
      %s29 = ssub.s32 %s24, 1
      %s30 = ssub.s32 %s24, 2
      %s37 = sadd.s32 1, %s32
      %p38 = scmp.ge.s32.totalorder %s37, 2
      %s39 = scalar_select %p38, 0, %s37
      %s40 = sadd.s32 1, %s31
      %s41 = scalar_select %p38, %s40, %s31
      %p42 = scmp.ge.s32.totalorder %s41, 1
      %s43 = scalar_select %p42, 0, %s41
      %s44 = ssub.s32 %s31, %s43
      %p45 = scmp.eq.s32.totalorder %s44, 0
      %s47 = sadd.s32 %s46, 1
      %s48 = scalar_select %p45, %s46, %s47
      %p51 = pneg %p45
      %p52 = scmp.eq.s32.totalorder %s24, 1
      %p53 = por %p51, %p52
      %p54 = scmp.ne.s32.totalorder %s46, %s49
      %p55 = scmp.eq.s32.totalorder %s24, 0
      %p56 = por %p54, %p55
      %p57 = scmp.ne.s32.totalorder %s46, %s49
      %p58 = scmp.eq.s32.totalorder %s29, 1
      %p59 = por %p57, %p58
      %p60 = scmp.ne.s32.totalorder %s49, %s50
      %p61 = scmp.eq.s32.totalorder %s29, 0
      %p62 = por %p60, %p61
      %p63 = scmp.ne.s32.totalorder %s49, %s50
      %p64 = scmp.eq.s32.totalorder %s30, 1
      %p65 = por %p63, %p64
      %p67 = scmp.ne.s32.totalorder %s50, %s66
      %p68 = scmp.eq.s32.totalorder %s30, 0
      %p69 = por %p67, %p68
      %s71 = sadd.s32 %s70, 1
      %p74 = scmp.eq.s32.totalorder %s24, 1
      %p75 = scmp.ne.s32.totalorder %s70, %s72
      %p76 = scmp.eq.s32.totalorder %s24, 0
      %p77 = por %p75, %p76
      %p78 = scmp.ne.s32.totalorder %s70, %s72
      %p79 = scmp.eq.s32.totalorder %s29, 1
      %p80 = por %p78, %p79
      %p81 = scmp.ne.s32.totalorder %s72, %s73
      %p82 = scmp.eq.s32.totalorder %s29, 0
      %p83 = por %p81, %p82
      %p84 = scmp.ne.s32.totalorder %s72, %s73
      %p85 = scmp.eq.s32.totalorder %s30, 1
      %p86 = por %p84, %p85
      %p88 = scmp.ne.s32.totalorder %s73, %s87
      %p89 = scmp.eq.s32.totalorder %s30, 0
      %p90 = por %p88, %p89
      %s92 = sadd.s32 %s91, 1
      %p95 = scmp.eq.s32.totalorder %s24, 1
      %p96 = scmp.ne.s32.totalorder %s91, %s93
      %p97 = scmp.eq.s32.totalorder %s24, 0
      %p98 = por %p96, %p97
      %p99 = scmp.ne.s32.totalorder %s91, %s93
      %p100 = scmp.eq.s32.totalorder %s29, 1
      %p101 = por %p99, %p100
      %p102 = scmp.ne.s32.totalorder %s93, %s94
      %p103 = scmp.eq.s32.totalorder %s29, 0
      %p104 = por %p102, %p103
      %p105 = scmp.ne.s32.totalorder %s93, %s94
      %p106 = scmp.eq.s32.totalorder %s30, 1
      %p107 = por %p105, %p106
      %p109 = scmp.ne.s32.totalorder %s94, %s108
      %p110 = scmp.eq.s32.totalorder %s30, 0
      %p111 = por %p109, %p110
      %s112 = ssub.s32 %s32, %s39
      %p113 = scmp.eq.s32.totalorder %s112, 0
      %s115 = sadd.s32 %s114, 1
      %s116 = scalar_select %p113, %s114, %s115
      %p119 = pneg %p113
      %p120 = scmp.eq.s32.totalorder %s24, 1
      %p121 = por %p119, %p120
      %p122 = scmp.ne.s32.totalorder %s114, %s117
      %p123 = scmp.eq.s32.totalorder %s24, 0
      %p124 = por %p122, %p123
      %p125 = scmp.ne.s32.totalorder %s114, %s117
      %p126 = scmp.eq.s32.totalorder %s29, 1
      %p127 = por %p125, %p126
      %p128 = scmp.ne.s32.totalorder %s117, %s118
      %p129 = scmp.eq.s32.totalorder %s29, 0
      %p130 = por %p128, %p129
      %p131 = scmp.ne.s32.totalorder %s117, %s118
      %p132 = scmp.eq.s32.totalorder %s30, 1
      %p133 = por %p131, %p132
      %p135 = scmp.ne.s32.totalorder %s118, %s134
      %p136 = scmp.eq.s32.totalorder %s30, 0
      %p137 = por %p135, %p136
      %s138 = ssub.s32 %s32, %s39
      %p139 = scmp.eq.s32.totalorder %s138, 0
      %s141 = sadd.s32 %s140, 1
      %s142 = scalar_select %p139, %s140, %s141
      %p145 = pneg %p139
      %p146 = scmp.eq.s32.totalorder %s24, 1
      %p147 = por %p145, %p146
      %p148 = scmp.ne.s32.totalorder %s140, %s143
      %p149 = scmp.eq.s32.totalorder %s24, 0
      %p150 = por %p148, %p149
      %p151 = scmp.ne.s32.totalorder %s140, %s143
      %p152 = scmp.eq.s32.totalorder %s29, 1
      %p153 = por %p151, %p152
      %p154 = scmp.ne.s32.totalorder %s143, %s144
      %p155 = scmp.eq.s32.totalorder %s29, 0
      %p156 = por %p154, %p155
      %p157 = scmp.ne.s32.totalorder %s143, %s144
      %p158 = scmp.eq.s32.totalorder %s30, 1
      %p159 = por %p157, %p158
      %p161 = scmp.ne.s32.totalorder %s144, %s160
      %p162 = scmp.eq.s32.totalorder %s30, 0
      %p163 = por %p161, %p162
      %s164 = ssub.s32 %s32, %s39
      %p165 = scmp.eq.s32.totalorder %s164, 0
      %s167 = sadd.s32 %s166, 1
      %s168 = scalar_select %p165, %s166, %s167
      %p171 = pneg %p165
      %p172 = scmp.eq.s32.totalorder %s24, 1
      %p173 = por %p171, %p172
      %p174 = scmp.ne.s32.totalorder %s166, %s169
      %p175 = scmp.eq.s32.totalorder %s24, 0
      %p176 = por %p174, %p175
      %p177 = scmp.ne.s32.totalorder %s166, %s169
      %p178 = scmp.eq.s32.totalorder %s29, 1
      %p179 = por %p177, %p178
      %p180 = scmp.ne.s32.totalorder %s169, %s170
      %p181 = scmp.eq.s32.totalorder %s29, 0
      %p182 = por %p180, %p181
      %p183 = scmp.ne.s32.totalorder %s169, %s170
      %p184 = scmp.eq.s32.totalorder %s30, 1
      %p185 = por %p183, %p184
      %p187 = scmp.ne.s32.totalorder %s170, %s186
      %p188 = scmp.eq.s32.totalorder %s30, 0
      %p189 = por %p187, %p188
      %s190 = ssub.s32 %s32, %s39
      %p191 = scmp.eq.s32.totalorder %s190, 0
      %s193 = sadd.s32 %s192, 1
      %s194 = scalar_select %p191, %s192, %s193
      %p197 = pneg %p191
      %p198 = scmp.eq.s32.totalorder %s24, 1
      %p199 = por %p197, %p198
      %p200 = scmp.ne.s32.totalorder %s192, %s195
      %p201 = scmp.eq.s32.totalorder %s24, 0
      %p202 = por %p200, %p201
      %p203 = scmp.ne.s32.totalorder %s192, %s195
      %p204 = scmp.eq.s32.totalorder %s29, 1
      %p205 = por %p203, %p204
      %p206 = scmp.ne.s32.totalorder %s195, %s196
      %p207 = scmp.eq.s32.totalorder %s29, 0
      %p208 = por %p206, %p207
      %p209 = scmp.ne.s32.totalorder %s195, %s196
      %p210 = scmp.eq.s32.totalorder %s30, 1
      %p211 = por %p209, %p210
      %p213 = scmp.ne.s32.totalorder %s196, %s212
      %p214 = scmp.eq.s32.totalorder %s30, 0
      %p215 = por %p213, %p214
      %s216 = ssub.s32 %s32, %s39
      %p217 = scmp.eq.s32.totalorder %s216, 0
      %s219 = sadd.s32 %s218, 1
      %s220 = scalar_select %p217, %s218, %s219
      %p223 = pneg %p217
      %p224 = scmp.eq.s32.totalorder %s24, 1
      %p225 = por %p223, %p224
      %p226 = scmp.ne.s32.totalorder %s218, %s221
      %p227 = scmp.eq.s32.totalorder %s24, 0
      %p228 = por %p226, %p227
      %p229 = scmp.ne.s32.totalorder %s218, %s221
      %p230 = scmp.eq.s32.totalorder %s29, 1
      %p231 = por %p229, %p230
      %p232 = scmp.ne.s32.totalorder %s221, %s222
      %p233 = scmp.eq.s32.totalorder %s29, 0
      %p234 = por %p232, %p233
      %p235 = scmp.ne.s32.totalorder %s221, %s222
      %p236 = scmp.eq.s32.totalorder %s30, 1
      %p237 = por %p235, %p236
      %p239 = scmp.ne.s32.totalorder %s222, %s238
      %p240 = scmp.eq.s32.totalorder %s30, 0
      %p241 = por %p239, %p240
      %s242 = ssub.s32 %s32, %s39
      %p243 = scmp.eq.s32.totalorder %s242, 0
      %s245 = sadd.s32 %s244, 1
      %s246 = scalar_select %p243, %s244, %s245
      %p249 = pneg %p243
      %p250 = scmp.eq.s32.totalorder %s24, 1
      %p251 = por %p249, %p250
      %p252 = scmp.ne.s32.totalorder %s244, %s247
      %p253 = scmp.eq.s32.totalorder %s24, 0
      %p254 = por %p252, %p253
      %p255 = scmp.ne.s32.totalorder %s244, %s247
      %p256 = scmp.eq.s32.totalorder %s29, 1
      %p257 = por %p255, %p256
      %p258 = scmp.ne.s32.totalorder %s247, %s248
      %p259 = scmp.eq.s32.totalorder %s29, 0
      %p260 = por %p258, %p259
      %p261 = scmp.ne.s32.totalorder %s247, %s248
      %p262 = scmp.eq.s32.totalorder %s30, 1
      %p263 = por %p261, %p262
      %p265 = scmp.ne.s32.totalorder %s248, %s264
      %p266 = scmp.eq.s32.totalorder %s30, 0
      %p267 = por %p265, %p266
      %s268 = ssub.s32 %s32, %s39
      %p269 = scmp.eq.s32.totalorder %s268, 0
      %s271 = sadd.s32 %s270, 1
      %s272 = scalar_select %p269, %s270, %s271
      %p275 = pneg %p269
      %p276 = scmp.eq.s32.totalorder %s24, 1
      %p277 = por %p275, %p276
      %p278 = scmp.ne.s32.totalorder %s270, %s273
      %p279 = scmp.eq.s32.totalorder %s24, 0
      %p280 = por %p278, %p279
      %p281 = scmp.ne.s32.totalorder %s270, %s273
      %p282 = scmp.eq.s32.totalorder %s29, 1
      %p283 = por %p281, %p282
      %p284 = scmp.ne.s32.totalorder %s273, %s274
      %p285 = scmp.eq.s32.totalorder %s29, 0
      %p286 = por %p284, %p285
      %p287 = scmp.ne.s32.totalorder %s273, %s274
      %p288 = scmp.eq.s32.totalorder %s30, 1
      %p289 = por %p287, %p288
      %p291 = scmp.ne.s32.totalorder %s274, %s290
      %p292 = scmp.eq.s32.totalorder %s30, 0
      %p293 = por %p291, %p292
      %s294 = ssub.s32 %s32, %s39
      %p295 = scmp.eq.s32.totalorder %s294, 0
      %s297 = sadd.s32 %s296, 1
      %s298 = scalar_select %p295, %s296, %s297
      %p301 = pneg %p295
      %p302 = scmp.eq.s32.totalorder %s24, 1
      %p303 = por %p301, %p302
      %p304 = scmp.ne.s32.totalorder %s296, %s299
      %p305 = scmp.eq.s32.totalorder %s24, 0
      %p306 = por %p304, %p305
      %p307 = scmp.ne.s32.totalorder %s296, %s299
      %p308 = scmp.eq.s32.totalorder %s29, 1
      %p309 = por %p307, %p308
      %p310 = scmp.ne.s32.totalorder %s299, %s300
      %p311 = scmp.eq.s32.totalorder %s29, 0
      %p312 = por %p310, %p311
      %p313 = scmp.ne.s32.totalorder %s299, %s300
      %p314 = scmp.eq.s32.totalorder %s30, 1
      %p315 = por %p313, %p314
      %p317 = scmp.ne.s32.totalorder %s300, %s316
      %p318 = scmp.eq.s32.totalorder %s30, 0
      %p319 = por %p317, %p318
      %s320 = ssub.s32 %s32, %s39
      %p321 = scmp.eq.s32.totalorder %s320, 0
      %s323 = sadd.s32 %s322, 1
      %s324 = scalar_select %p321, %s322, %s323
      %p327 = pneg %p321
      %p328 = scmp.eq.s32.totalorder %s24, 1
      %p329 = por %p327, %p328
      %p330 = scmp.ne.s32.totalorder %s322, %s325
      %p331 = scmp.eq.s32.totalorder %s24, 0
      %p332 = por %p330, %p331
      %p333 = scmp.ne.s32.totalorder %s322, %s325
      %p334 = scmp.eq.s32.totalorder %s29, 1
      %p335 = por %p333, %p334
      %p336 = scmp.ne.s32.totalorder %s325, %s326
      %p337 = scmp.eq.s32.totalorder %s29, 0
      %p338 = por %p336, %p337
      %p339 = scmp.ne.s32.totalorder %s325, %s326
      %p340 = scmp.eq.s32.totalorder %s30, 1
      %p341 = por %p339, %p340
      %p343 = scmp.ne.s32.totalorder %s326, %s342
      %p344 = scmp.eq.s32.totalorder %s30, 0
      %p345 = por %p343, %p344
      %s346 = ssub.s32 %s32, %s39
      %p347 = scmp.eq.s32.totalorder %s346, 0
      %s349 = sadd.s32 %s348, 1
      %s350 = scalar_select %p347, %s348, %s349
      %p353 = pneg %p347
      %p354 = scmp.eq.s32.totalorder %s24, 1
      %p355 = por %p353, %p354
      %p356 = scmp.ne.s32.totalorder %s348, %s351
      %p357 = scmp.eq.s32.totalorder %s24, 0
      %p358 = por %p356, %p357
      %p359 = scmp.ne.s32.totalorder %s348, %s351
      %p360 = scmp.eq.s32.totalorder %s29, 1
      %p361 = por %p359, %p360
      %p362 = scmp.ne.s32.totalorder %s351, %s352
      %p363 = scmp.eq.s32.totalorder %s29, 0
      %p364 = por %p362, %p363
      %p365 = scmp.ne.s32.totalorder %s351, %s352
      %p366 = scmp.eq.s32.totalorder %s30, 1
      %p367 = por %p365, %p366
      %p369 = scmp.ne.s32.totalorder %s352, %s368
      %p370 = scmp.eq.s32.totalorder %s30, 0
      %p371 = por %p369, %p370
      %s372 = ssub.s32 %s32, %s39
      %p373 = scmp.eq.s32.totalorder %s372, 0
      %s375 = sadd.s32 %s374, 1
      %s376 = scalar_select %p373, %s374, %s375
      %p379 = pneg %p373
      %p380 = scmp.eq.s32.totalorder %s24, 1
      %p381 = por %p379, %p380
      %p382 = scmp.ne.s32.totalorder %s374, %s377
      %p383 = scmp.eq.s32.totalorder %s24, 0
      %p384 = por %p382, %p383
      %p385 = scmp.ne.s32.totalorder %s374, %s377
      %p386 = scmp.eq.s32.totalorder %s29, 1
      %p387 = por %p385, %p386
      %p388 = scmp.ne.s32.totalorder %s377, %s378
      %p389 = scmp.eq.s32.totalorder %s29, 0
      %p390 = por %p388, %p389
      %p391 = scmp.ne.s32.totalorder %s377, %s378
      %p392 = scmp.eq.s32.totalorder %s30, 1
      %p393 = por %p391, %p392
      %p395 = scmp.ne.s32.totalorder %s378, %s394
      %p396 = scmp.eq.s32.totalorder %s30, 0
      %p397 = por %p395, %p396
      %s398 = ssub.s32 %s32, %s39
      %p399 = scmp.eq.s32.totalorder %s398, 0
      %s401 = sadd.s32 %s400, 1
      %s402 = scalar_select %p399, %s400, %s401
      %p405 = pneg %p399
      %p406 = scmp.eq.s32.totalorder %s24, 1
      %p407 = por %p405, %p406
      %p408 = scmp.ne.s32.totalorder %s400, %s403
      %p409 = scmp.eq.s32.totalorder %s24, 0
      %p410 = por %p408, %p409
      %p411 = scmp.ne.s32.totalorder %s400, %s403
      %p412 = scmp.eq.s32.totalorder %s29, 1
      %p413 = por %p411, %p412
      %p414 = scmp.ne.s32.totalorder %s403, %s404
      %p415 = scmp.eq.s32.totalorder %s29, 0
      %p416 = por %p414, %p415
      %p417 = scmp.ne.s32.totalorder %s403, %s404
      %p418 = scmp.eq.s32.totalorder %s30, 1
      %p419 = por %p417, %p418
      %p421 = scmp.ne.s32.totalorder %s404, %s420
      %p422 = scmp.eq.s32.totalorder %s30, 0
      %p423 = por %p421, %p422
      %s425 = sadd.s32 %s424, 1
      %p428 = scmp.eq.s32.totalorder %s24, 1
      %p429 = scmp.ne.s32.totalorder %s424, %s426
      %p430 = scmp.eq.s32.totalorder %s24, 0
      %p431 = por %p429, %p430
      %p432 = scmp.ne.s32.totalorder %s424, %s426
      %p433 = scmp.eq.s32.totalorder %s29, 1
      %p434 = por %p432, %p433
      %p435 = scmp.ne.s32.totalorder %s426, %s427
      %p436 = scmp.eq.s32.totalorder %s29, 0
      %p437 = por %p435, %p436
      %p438 = scmp.ne.s32.totalorder %s426, %s427
      %p439 = scmp.eq.s32.totalorder %s30, 1
      %p440 = por %p438, %p439
      %p442 = scmp.ne.s32.totalorder %s427, %s441
      %p443 = scmp.eq.s32.totalorder %s30, 0
      %p444 = por %p442, %p443
      %s446 = sadd.s32 %s445, 1
      %p449 = scmp.eq.s32.totalorder %s24, 1
      %p450 = scmp.ne.s32.totalorder %s445, %s447
      %p451 = scmp.eq.s32.totalorder %s24, 0
      %p452 = por %p450, %p451
      %p453 = scmp.ne.s32.totalorder %s445, %s447
      %p454 = scmp.eq.s32.totalorder %s29, 1
      %p455 = por %p453, %p454
      %p456 = scmp.ne.s32.totalorder %s447, %s448
      %p457 = scmp.eq.s32.totalorder %s29, 0
      %p458 = por %p456, %p457
      %p459 = scmp.ne.s32.totalorder %s447, %s448
      %p460 = scmp.eq.s32.totalorder %s30, 1
      %p461 = por %p459, %p460
      %p463 = scmp.ne.s32.totalorder %s448, %s462
      %p464 = scmp.eq.s32.totalorder %s30, 0
      %p465 = por %p463, %p464
      %s466 = ssub.s32 %s31, %s43
      %p467 = scmp.eq.s32.totalorder %s466, 0
      %s469 = sadd.s32 %s468, 1
      %s470 = scalar_select %p467, %s468, %s469
      %p473 = pneg %p467
      %p474 = scmp.eq.s32.totalorder %s24, 1
      %p475 = por %p473, %p474
      %p476 = scmp.ne.s32.totalorder %s468, %s471
      %p477 = scmp.eq.s32.totalorder %s24, 0
      %p478 = por %p476, %p477
      %p479 = scmp.ne.s32.totalorder %s468, %s471
      %p480 = scmp.eq.s32.totalorder %s29, 1
      %p481 = por %p479, %p480
      %p482 = scmp.ne.s32.totalorder %s471, %s472
      %p483 = scmp.eq.s32.totalorder %s29, 0
      %p484 = por %p482, %p483
      %p485 = scmp.ne.s32.totalorder %s471, %s472
      %p486 = scmp.eq.s32.totalorder %s30, 1
      %p487 = por %p485, %p486
      %p489 = scmp.ne.s32.totalorder %s472, %s488
      %p490 = scmp.eq.s32.totalorder %s30, 0
      %p491 = por %p489, %p490
      %p492 = scmp.le.s32.totalorder 1, %s24
      %p493 = scmp.lt.s32.totalorder %s24, 3
      %p494 = pnand %p492, %p493
      %p495 = pneg %p494
      // Predicated region
      $region9: #{transformer_forward.1} parent=5 // pred_check
        _
      $region10: #{transformer_forward.1} parent=5 // pred_check_branch
        %497 = sbr.rel (%p494) target = $region12
      $region11: #{transformer_forward.1} parent=5 // pred_region
        %s498 = ssub.s32 %s24, 1
        // Predicated region
        $region13: #{transformer_forward.1} parent=11 // pred_check
          %p499 = pneg %p62
        $region14: #{transformer_forward.1} parent=11 // pred_check_branch
          %501 = sbr.rel (%p499) target = $region16
        $region15: #{transformer_forward.1} parent=11 // pred_region
          %s502 = smul.u32 2, %s33
          %p503 = scmp.lt.s32.totalorder %s502, 1
          %s504 = scalar_select %p503, %s502, 1
          %s505 = smul.addr %s504, 8
          %s506 = scalar_lea.vmem %s0, %s505
          %s507 = smul.u32 2, %s33
        $region16: #{transformer_forward.1} parent=11 // pred_fallthru
          _
        // Predicated region
        $region17: #{transformer_forward.1} parent=11 // pred_check
          %p508 = pneg %p83
        $region18: #{transformer_forward.1} parent=11 // pred_check_branch
          %510 = sbr.rel (%p508) target = $region20
        $region19: #{transformer_forward.1} parent=11 // pred_region
          _
        $region20: #{transformer_forward.1} parent=11 // pred_fallthru
          _
        // Predicated region
        $region21: #{transformer_forward.1} parent=11 // pred_check
          %p511 = pneg %p104
        $region22: #{transformer_forward.1} parent=11 // pred_check_branch
          %513 = sbr.rel (%p511) target = $region24
        $region23: #{transformer_forward.1} parent=11 // pred_region
          _
        $region24: #{transformer_forward.1} parent=11 // pred_fallthru
          _
        // Predicated region
        $region25: #{transformer_forward.1} parent=11 // pred_check
          %p514 = pneg %p437
        $region26: #{transformer_forward.1} parent=11 // pred_check_branch
          %516 = sbr.rel (%p514) target = $region28
        $region27: #{transformer_forward.1} parent=11 // pred_region
          _
        $region28: #{transformer_forward.1} parent=11 // pred_fallthru
          _
        // Predicated region
        $region29: #{transformer_forward.1} parent=11 // pred_check
          %p517 = pneg %p458
        $region30: #{transformer_forward.1} parent=11 // pred_check_branch
          %519 = sbr.rel (%p517) target = $region32
        $region31: #{transformer_forward.1} parent=11 // pred_region
          _
        $region32: #{transformer_forward.1} parent=11 // pred_fallthru
          _
      $region12: #{transformer_forward.1} parent=5 // pred_fallthru
        _
      %p520 = scmp.lt.s32.totalorder %s24, 2
      // Predicated region
      $region33: #{transformer_forward.1} parent=5 // pred_check
        %p521 = pneg %p520
      $region34: #{transformer_forward.1} parent=5 // pred_check_branch
        %523 = sbr.rel (%p521) target = $region36
      $region35: #{transformer_forward.1} parent=5 // pred_region
        // Predicated region
        $region37: #{transformer_forward.1} parent=35 // pred_check
          %p524 = pneg %p124
        $region38: #{transformer_forward.1} parent=35 // pred_check_branch
          %526 = sbr.rel (%p524) target = $region40
        $region39: #{transformer_forward.1} parent=35 // pred_region
          %p527 = scmp.lt.s32.totalorder %s32, 1
          %s528 = scalar_select %p527, %s32, 1
          %s529 = smul.addr %s528, 48
          %s530 = smul.addr %s529, 4
          %s531 = scalar_lea.vmem %s3, %s530
        $region40: #{transformer_forward.1} parent=35 // pred_fallthru
          _
        // Predicated region
        $region41: #{transformer_forward.1} parent=35 // pred_check
          %p532 = pneg %p150
        $region42: #{transformer_forward.1} parent=35 // pred_check_branch
          %534 = sbr.rel (%p532) target = $region44
        $region43: #{transformer_forward.1} parent=35 // pred_region
          %p535 = scmp.lt.s32.totalorder %s32, 1
          %s536 = scalar_select %p535, %s32, 1
          %s537 = smul.addr %s536, 3
          %s538 = scalar_lea.vmem %s4, %s537
        $region44: #{transformer_forward.1} parent=35 // pred_fallthru
          _
        // Predicated region
        $region45: #{transformer_forward.1} parent=35 // pred_check
          %p539 = pneg %p176
        $region46: #{transformer_forward.1} parent=35 // pred_check_branch
          %541 = sbr.rel (%p539) target = $region48
        $region47: #{transformer_forward.1} parent=35 // pred_region
          %p542 = scmp.lt.s32.totalorder %s32, 1
          %s543 = scalar_select %p542, %s32, 1
          %s544 = smul.addr %s543, 16
          %s545 = smul.addr %s544, 4
          %s546 = scalar_lea.vmem %s5, %s545
        $region48: #{transformer_forward.1} parent=35 // pred_fallthru
          _
        // Predicated region
        $region49: #{transformer_forward.1} parent=35 // pred_check
          %p547 = pneg %p202
        $region50: #{transformer_forward.1} parent=35 // pred_check_branch
          %549 = sbr.rel (%p547) target = $region52
        $region51: #{transformer_forward.1} parent=35 // pred_region
          %p550 = scmp.lt.s32.totalorder %s32, 1
          %s551 = scalar_select %p550, %s32, 1
          %s552 = scalar_lea.vmem %s6, %s551
        $region52: #{transformer_forward.1} parent=35 // pred_fallthru
          _
        // Predicated region
        $region53: #{transformer_forward.1} parent=35 // pred_check
          %p553 = pneg %p228
        $region54: #{transformer_forward.1} parent=35 // pred_check_branch
          %555 = sbr.rel (%p553) target = $region56
        $region55: #{transformer_forward.1} parent=35 // pred_region
          %p556 = scmp.lt.s32.totalorder %s32, 1
          %s557 = scalar_select %p556, %s32, 1
          %s558 = scalar_lea.vmem %s7, %s557
        $region56: #{transformer_forward.1} parent=35 // pred_fallthru
          _
        // Predicated region
        $region57: #{transformer_forward.1} parent=35 // pred_check
          %p559 = pneg %p254
        $region58: #{transformer_forward.1} parent=35 // pred_check_branch
          %561 = sbr.rel (%p559) target = $region60
        $region59: #{transformer_forward.1} parent=35 // pred_region
          %p562 = scmp.lt.s32.totalorder %s32, 1
          %s563 = scalar_select %p562, %s32, 1
          %s564 = scalar_lea.vmem %s8, %s563
        $region60: #{transformer_forward.1} parent=35 // pred_fallthru
          _
        // Predicated region
        $region61: #{transformer_forward.1} parent=35 // pred_check
          %p565 = pneg %p280
        $region62: #{transformer_forward.1} parent=35 // pred_check_branch
          %567 = sbr.rel (%p565) target = $region64
        $region63: #{transformer_forward.1} parent=35 // pred_region
          %p568 = scmp.lt.s32.totalorder %s32, 1
          %s569 = scalar_select %p568, %s32, 1
          %s570 = smul.addr %s569, 16
          %s571 = smul.addr %s570, 4
          %s572 = scalar_lea.vmem %s9, %s571
        $region64: #{transformer_forward.1} parent=35 // pred_fallthru
          _
        // Predicated region
        $region65: #{transformer_forward.1} parent=35 // pred_check
          %p573 = pneg %p306
        $region66: #{transformer_forward.1} parent=35 // pred_check_branch
          %575 = sbr.rel (%p573) target = $region68
        $region67: #{transformer_forward.1} parent=35 // pred_region
          %p576 = scmp.lt.s32.totalorder %s32, 1
          %s577 = scalar_select %p576, %s32, 1
          %s578 = scalar_lea.vmem %s10, %s577
        $region68: #{transformer_forward.1} parent=35 // pred_fallthru
          _
        // Predicated region
        $region69: #{transformer_forward.1} parent=35 // pred_check
          %p579 = pneg %p332
        $region70: #{transformer_forward.1} parent=35 // pred_check_branch
          %581 = sbr.rel (%p579) target = $region72
        $region71: #{transformer_forward.1} parent=35 // pred_region
          %p582 = scmp.lt.s32.totalorder %s32, 1
          %s583 = scalar_select %p582, %s32, 1
          %s584 = smul.addr %s583, 16
          %s585 = smul.addr %s584, 4
          %s586 = scalar_lea.vmem %s11, %s585
        $region72: #{transformer_forward.1} parent=35 // pred_fallthru
          _
        // Predicated region
        $region73: #{transformer_forward.1} parent=35 // pred_check
          %p587 = pneg %p358
        $region74: #{transformer_forward.1} parent=35 // pred_check_branch
          %589 = sbr.rel (%p587) target = $region76
        $region75: #{transformer_forward.1} parent=35 // pred_region
          %p590 = scmp.lt.s32.totalorder %s32, 1
          %s591 = scalar_select %p590, %s32, 1
          %s592 = scalar_lea.vmem %s12, %s591
        $region76: #{transformer_forward.1} parent=35 // pred_fallthru
          _
        // Predicated region
        $region77: #{transformer_forward.1} parent=35 // pred_check
          %p593 = pneg %p384
        $region78: #{transformer_forward.1} parent=35 // pred_check_branch
          %595 = sbr.rel (%p593) target = $region80
        $region79: #{transformer_forward.1} parent=35 // pred_region
          %p596 = scmp.lt.s32.totalorder %s32, 1
          %s597 = scalar_select %p596, %s32, 1
          %s598 = scalar_lea.vmem %s13, %s597
        $region80: #{transformer_forward.1} parent=35 // pred_fallthru
          _
        // Predicated region
        $region81: #{transformer_forward.1} parent=35 // pred_check
          %p599 = pneg %p410
        $region82: #{transformer_forward.1} parent=35 // pred_check_branch
          %601 = sbr.rel (%p599) target = $region84
        $region83: #{transformer_forward.1} parent=35 // pred_region
          %p602 = scmp.lt.s32.totalorder %s32, 1
          %s603 = scalar_select %p602, %s32, 1
          %s604 = scalar_lea.vmem %s14, %s603
        $region84: #{transformer_forward.1} parent=35 // pred_fallthru
          _
      $region36: #{transformer_forward.1} parent=5 // pred_fallthru
        _
      %p605 = scmp.le.s32.totalorder 1, %s24
      %p606 = scmp.lt.s32.totalorder %s24, 3
      %p607 = pnand %p605, %p606
      %p608 = pneg %p607
      // Predicated region
      $region85: #{transformer_forward.1} parent=5 // pred_check
        _
      $region86: #{transformer_forward.1} parent=5 // pred_check_branch
        %610 = sbr.rel (%p607) target = $region88
      $region87: #{transformer_forward.1} parent=5 // pred_region
        %s611 = ssub.s32 %s24, 1
        %s612 = smul.u32 2, %s33
        %p613 = scmp.lt.s32.totalorder %s612, 1
        %s614 = scalar_select %p613, %s612, 1
        %s615 = smul.addr %s614, 8
        %s616 = scalar_lea.vmem %s0, %s615
        %p617 = pneg %p62
        %p618 = pneg %p59
        %p619 = pneg %p83
        %p620 = pneg %p80
        %p621 = pneg %p104
        %p622 = pneg %p101
        %p623 = scmp.lt.s32.totalorder %s34, 1
        %s624 = scalar_select %p623, %s34, 1
        %s625 = smul.addr %s624, 48
        %s626 = smul.addr %s625, 4
        %s627 = scalar_lea.vmem %s3, %s626
        %p628 = pneg %p130
        %p629 = pneg %p127
        %p630 = scmp.lt.s32.totalorder %s34, 1
        %s631 = scalar_select %p630, %s34, 1
        %s632 = smul.addr %s631, 3
        %s633 = scalar_lea.vmem %s4, %s632
        %p634 = pneg %p156
        %p635 = pneg %p153
        %p636 = scmp.lt.s32.totalorder %s34, 1
        %s637 = scalar_select %p636, %s34, 1
        %s638 = smul.addr %s637, 16
        %s639 = smul.addr %s638, 4
        %s640 = scalar_lea.vmem %s5, %s639
        %p641 = pneg %p182
        %p642 = pneg %p179
        %p643 = scmp.lt.s32.totalorder %s34, 1
        %s644 = scalar_select %p643, %s34, 1
        %s645 = scalar_lea.vmem %s6, %s644
        %p646 = pneg %p208
        %p647 = pneg %p205
        %p648 = scmp.lt.s32.totalorder %s34, 1
        %s649 = scalar_select %p648, %s34, 1
        %s650 = scalar_lea.vmem %s7, %s649
        %p651 = pneg %p234
        %p652 = pneg %p231
        %p653 = scmp.lt.s32.totalorder %s34, 1
        %s654 = scalar_select %p653, %s34, 1
        %s655 = scalar_lea.vmem %s8, %s654
        %p656 = pneg %p260
        %p657 = pneg %p257
        %p658 = scmp.lt.s32.totalorder %s34, 1
        %s659 = scalar_select %p658, %s34, 1
        %s660 = smul.addr %s659, 16
        %s661 = smul.addr %s660, 4
        %s662 = scalar_lea.vmem %s9, %s661
        %p663 = pneg %p286
        %p664 = pneg %p283
        %p665 = scmp.lt.s32.totalorder %s34, 1
        %s666 = scalar_select %p665, %s34, 1
        %s667 = scalar_lea.vmem %s10, %s666
        %p668 = pneg %p312
        %p669 = pneg %p309
        %p670 = scmp.lt.s32.totalorder %s34, 1
        %s671 = scalar_select %p670, %s34, 1
        %s672 = smul.addr %s671, 16
        %s673 = smul.addr %s672, 4
        %s674 = scalar_lea.vmem %s11, %s673
        %p675 = pneg %p338
        %p676 = pneg %p335
        %p677 = scmp.lt.s32.totalorder %s34, 1
        %s678 = scalar_select %p677, %s34, 1
        %s679 = scalar_lea.vmem %s12, %s678
        %p680 = pneg %p364
        %p681 = pneg %p361
        %p682 = scmp.lt.s32.totalorder %s34, 1
        %s683 = scalar_select %p682, %s34, 1
        %s684 = scalar_lea.vmem %s13, %s683
        %p685 = pneg %p390
        %p686 = pneg %p387
        %p687 = scmp.lt.s32.totalorder %s34, 1
        %s688 = scalar_select %p687, %s34, 1
        %s689 = scalar_lea.vmem %s14, %s688
        %p690 = pneg %p416
        %p691 = pneg %p413
        %p692 = pneg %p437
        %p693 = pneg %p434
        %p694 = pneg %p458
        %p695 = pneg %p455
        %p696 = pneg %p484
        %p697 = pneg %p481
        %s698 = smul.u32 2, %s33
        %p699 = scmp.lt.s32.totalorder %s698, 1
        %s700 = scalar_select %p699, %s698, 1
        %s701 = smul.addr %s700, 8
        %s702 = scalar_lea.vmem %s0, %s701
        %s703 = smul.u32 2, %s33
        %p704 = scmp.lt.s32.totalorder %s34, 1
        %s705 = scalar_select %p704, %s34, 1
        %s706 = smul.addr %s705, 48
        %s707 = smul.addr %s706, 4
        %s708 = scalar_lea.vmem %s3, %s707
        %p709 = scmp.lt.s32.totalorder %s34, 1
        %s710 = scalar_select %p709, %s34, 1
        %s711 = smul.addr %s710, 3
        %s712 = scalar_lea.vmem %s4, %s711
        %p713 = scmp.lt.s32.totalorder %s34, 1
        %s714 = scalar_select %p713, %s34, 1
        %s715 = smul.addr %s714, 16
        %s716 = smul.addr %s715, 4
        %s717 = scalar_lea.vmem %s5, %s716
        %p718 = scmp.lt.s32.totalorder %s34, 1
        %s719 = scalar_select %p718, %s34, 1
        %s720 = scalar_lea.vmem %s6, %s719
        %p721 = scmp.lt.s32.totalorder %s34, 1
        %s722 = scalar_select %p721, %s34, 1
        %s723 = scalar_lea.vmem %s7, %s722
        %p724 = scmp.lt.s32.totalorder %s34, 1
        %s725 = scalar_select %p724, %s34, 1
        %s726 = scalar_lea.vmem %s8, %s725
        %p727 = scmp.lt.s32.totalorder %s34, 1
        %s728 = scalar_select %p727, %s34, 1
        %s729 = smul.addr %s728, 16
        %s730 = smul.addr %s729, 4
        %s731 = scalar_lea.vmem %s9, %s730
        %p732 = scmp.lt.s32.totalorder %s34, 1
        %s733 = scalar_select %p732, %s34, 1
        %s734 = scalar_lea.vmem %s10, %s733
        %p735 = scmp.lt.s32.totalorder %s34, 1
        %s736 = scalar_select %p735, %s34, 1
        %s737 = smul.addr %s736, 16
        %s738 = smul.addr %s737, 4
        %s739 = scalar_lea.vmem %s11, %s738
        %p740 = scmp.lt.s32.totalorder %s34, 1
        %s741 = scalar_select %p740, %s34, 1
        %s742 = scalar_lea.vmem %s12, %s741
        %p743 = scmp.lt.s32.totalorder %s34, 1
        %s744 = scalar_select %p743, %s34, 1
        %s745 = scalar_lea.vmem %s13, %s744
        %p746 = scmp.lt.s32.totalorder %s34, 1
        %s747 = scalar_select %p746, %s34, 1
        %s748 = scalar_lea.vmem %s14, %s747
        %s749 = smul.u32 2, %s33
        %p751 = scmp.eq.s32.totalorder %s34, 0
        // Predicated region
        $region89: #{transformer_forward.1} parent=87 // pred_check
          %p752 = pneg %p751
        $region90: #{transformer_forward.1} parent=87 // pred_check_branch
          %754 = sbr.rel (%p752) target = $region92
        $region91: #{transformer_forward.1} parent=87 // pred_region
          %v755 = vld [vmem:[%s702] sm:$0xff]
          %v756 = vld [vmem:[%s702 + $0x8] sm:$0xff]
          %v757 = vpack.c.bf16 %v756, %v755
          %v758 = vld [vmem:[%s1] sm:$0x3]
          %v759 = vld [vmem:[%s2] sm:$0x1]
          %v761 = vlaneseq
          %v762 = vshrl.u32 %v761, 7
          %v763 = vsub.s32 0, %v762
          %v764 = vrot.slane %v759, %v763
          %vm766 = vcmask 31744
          %v768 = vsel %vm766, %v757, 0
          %vm770 = vcmask 1041408
          %v772 = vsel %vm770, %v758, 0
          %774 = vmatprep.subr.bf16.mxu0 0
          %775 = vmatpush1.bf16.msra.mxu0 %v772
          %776 = vmatprep.subr.bf16.mxu0 0
          %777 = vmatpush1.bf16.msra.mxu0 0
          %778 = vmatprep.subr.bf16.mxu0 0
          %779 = vmatpush1.bf16.msra.mxu0 0
          %780 = vmatprep.subr.bf16.mxu0 0
          %781 = vmatpush1.bf16.msra.mxu0 0
          %782 = vmatprep.subr.bf16.mxu0 0
          %783 = vmatpush1.bf16.msra.mxu0 0
          %784 = vmatprep.subr.bf16.mxu0 0
          %785 = vmatpush1.bf16.msra.mxu0 0
          %786 = vmatprep.subr.bf16.mxu0 0
          %787 = vmatpush1.bf16.msra.mxu0 0
          %788 = vmatprep.subr.bf16.mxu0 0
          %789 = vmatpush1.bf16.msra.mxu0 0
          %790 = vmatprep.subr.bf16.mxu0 0
          %791 = vmatpush1.bf16.msra.mxu0 0
          %792 = vmatprep.subr.bf16.mxu0 0
          %793 = vmatpush1.bf16.msra.mxu0 0
          %794 = vmatprep.subr.bf16.mxu0 0
          %795 = vmatpush1.bf16.msra.mxu0 0
          %796 = vmatprep.subr.bf16.mxu0 0
          %797 = vmatpush1.bf16.msra.mxu0 0
          %798 = vmatprep.subr.bf16.mxu0 0
          %799 = vmatpush1.bf16.msra.mxu0 0
          %800 = vmatprep.subr.bf16.mxu0 0
          %801 = vmatpush1.bf16.msra.mxu0 0
          %802 = vmatprep.subr.bf16.mxu0 0
          %803 = vmatpush1.bf16.msra.mxu0 0
          %804 = vmatprep.subr.bf16.mxu0 0
          %805 = vmatpush1.bf16.msra.mxu0 0
          %806 = vmatprep.mubr.bf16.mxu0 0
          %807 = vmatmul.mubr.bf16.gmra.mrb[0].mxu0 %v768
          %v808 = vpop.f32.mrb[0].mxu0
          %v809 = vadd.f32 %v764, %v808
          %v810 = vpop.f32.mrb[0].mxu0
          %v811 = vpop.f32.mrb[0].mxu0
          %v812 = vadd.f32 %v764, %v811
          %v813 = vpop.f32.mrb[0].mxu0
          %814 = vdwg.mxu0
          %815 = vst [vmem:[#allocation2] sm:$0xff] %v809
          %816 = vst [vmem:[#allocation2 + $0x8] sm:$0xff] %v812
        $region92: #{transformer_forward.1} parent=87 // pred_fallthru
          _
        %v817 = vld [vmem:[#allocation2] sm:$0xff]
        %v818 = vld [vmem:[#allocation2 + $0x8] sm:$0xff]
        %v819 = vpack.c.bf16 %v818, %v817
        %v820 = vld [vmem:[%s708] sm:$0xff]
        %v821 = vld [vmem:[%s708 + $0x8] sm:$0xf]
        %v822 = vld [vmem:[%s708 + $0xc] sm:$0xff]
        %v823 = vld [vmem:[%s708 + $0x14] sm:$0xf]
        %v824 = vld [vmem:[%s708 + $0x18] sm:$0xff]
        %v825 = vld [vmem:[%s708 + $0x20] sm:$0xf]
        %v826 = vld [vmem:[%s708 + $0x24] sm:$0xff]
        %v827 = vld [vmem:[%s708 + $0x2c] sm:$0xf]
        %v828 = vld [vmem:[%s708 + $0x30] sm:$0xff]
        %v829 = vld [vmem:[%s708 + $0x38] sm:$0xf]
        %v830 = vld [vmem:[%s708 + $0x3c] sm:$0xff]
        %v831 = vld [vmem:[%s708 + $0x44] sm:$0xf]
        %v832 = vld [vmem:[%s708 + $0x48] sm:$0xff]
        %v833 = vld [vmem:[%s708 + $0x50] sm:$0xf]
        %v834 = vld [vmem:[%s708 + $0x54] sm:$0xff]
        %v835 = vld [vmem:[%s708 + $0x5c] sm:$0xf]
        %v836 = vld [vmem:[%s708 + $0x60] sm:$0xff]
        %v837 = vld [vmem:[%s708 + $0x68] sm:$0xf]
        %v838 = vld [vmem:[%s708 + $0x6c] sm:$0xff]
        %v839 = vld [vmem:[%s708 + $0x74] sm:$0xf]
        %v840 = vld [vmem:[%s708 + $0x78] sm:$0xff]
        %v841 = vld [vmem:[%s708 + $0x80] sm:$0xf]
        %v842 = vld [vmem:[%s708 + $0x84] sm:$0xff]
        %v843 = vld [vmem:[%s708 + $0x8c] sm:$0xf]
        %v844 = vld [vmem:[%s708 + $0x90] sm:$0xff]
        %v845 = vld [vmem:[%s708 + $0x98] sm:$0xf]
        %v846 = vld [vmem:[%s708 + $0x9c] sm:$0xff]
        %v847 = vld [vmem:[%s708 + $0xa4] sm:$0xf]
        %v848 = vld [vmem:[%s708 + $0xa8] sm:$0xff]
        %v849 = vld [vmem:[%s708 + $0xb0] sm:$0xf]
        %v850 = vld [vmem:[%s708 + $0xb4] sm:$0xff]
        %v851 = vld [vmem:[%s708 + $0xbc] sm:$0xf]
        %v852 = vld [vmem:[%s712] sm:$0x7]
        %v854 = vlaneseq
        %v855 = vshrl.u32 %v854, 7
        %v856 = vsub.s32 0, %v855
        %v857 = vrot.slane %v852, %v856
        %v858 = vlaneseq
        %v859 = vshrl.u32 %v858, 7
        %v860 = vsub.s32 1, %v859
        %v861 = vrot.slane %v852, %v860
        %v862 = vlaneseq
        %v863 = vshrl.u32 %v862, 7
        %v864 = vsub.s32 2, %v863
        %v865 = vrot.slane %v852, %v864
        %v901 = vunpack.c.l.b16 %v820
        %v902 = vunpack.c.h.b16 %v820
        %v903 = vunpack.c.l.b16 %v821
        %v904 = vunpack.c.l.b16 %v822
        %v905 = vunpack.c.h.b16 %v822
        %v906 = vunpack.c.l.b16 %v823
        %v907 = vunpack.c.l.b16 %v824
        %v908 = vunpack.c.h.b16 %v824
        %v909 = vunpack.c.l.b16 %v825
        %v910 = vunpack.c.l.b16 %v826
        %v911 = vunpack.c.h.b16 %v826
        %v912 = vunpack.c.l.b16 %v827
        %v913 = vunpack.c.l.b16 %v828
        %v914 = vunpack.c.h.b16 %v828
        %v915 = vunpack.c.l.b16 %v829
        %v916 = vunpack.c.l.b16 %v830
        %v917 = vunpack.c.h.b16 %v830
        %v918 = vunpack.c.l.b16 %v831
        %v919 = vunpack.c.l.b16 %v832
        %v920 = vunpack.c.h.b16 %v832
        %v921 = vunpack.c.l.b16 %v833
        %v922 = vunpack.c.l.b16 %v834
        %v923 = vunpack.c.h.b16 %v834
        %v924 = vunpack.c.l.b16 %v835
        %v925 = vunpack.c.l.b16 %v836
        %v926 = vunpack.c.h.b16 %v836
        %v927 = vunpack.c.l.b16 %v837
        %v928 = vunpack.c.l.b16 %v838
        %v929 = vunpack.c.h.b16 %v838
        %v930 = vunpack.c.l.b16 %v839
        %v931 = vunpack.c.l.b16 %v840
        %v932 = vunpack.c.h.b16 %v840
        %v933 = vunpack.c.l.b16 %v841
        %v934 = vunpack.c.l.b16 %v842
        %v935 = vunpack.c.h.b16 %v842
        %v936 = vunpack.c.l.b16 %v843
        %v937 = vunpack.c.l.b16 %v844
        %v938 = vunpack.c.h.b16 %v844
        %v939 = vunpack.c.l.b16 %v845
        %v940 = vunpack.c.l.b16 %v846
        %v941 = vunpack.c.h.b16 %v846
        %v942 = vunpack.c.l.b16 %v847
        %v943 = vunpack.c.l.b16 %v848
        %v944 = vunpack.c.h.b16 %v848
        %v945 = vunpack.c.l.b16 %v849
        %v946 = vunpack.c.l.b16 %v850
        %v947 = vunpack.c.h.b16 %v850
        %v948 = vunpack.c.l.b16 %v851
        %v949 = vpack.c.b16 %v904, %v901
        %v950 = vpack.c.b16 %v905, %v902
        %v951 = vpack.c.b16 %v906, %v903
        %v952 = vpack.c.b16 %v910, %v907
        %v953 = vpack.c.b16 %v911, %v908
        %v954 = vpack.c.b16 %v912, %v909
        %v955 = vpack.c.b16 %v916, %v913
        %v956 = vpack.c.b16 %v917, %v914
        %v957 = vpack.c.b16 %v918, %v915
        %v958 = vpack.c.b16 %v922, %v919
        %v959 = vpack.c.b16 %v923, %v920
        %v960 = vpack.c.b16 %v924, %v921
        %v961 = vpack.c.b16 %v928, %v925
        %v962 = vpack.c.b16 %v929, %v926
        %v963 = vpack.c.b16 %v930, %v927
        %v964 = vpack.c.b16 %v934, %v931
        %v965 = vpack.c.b16 %v935, %v932
        %v966 = vpack.c.b16 %v936, %v933
        %v967 = vpack.c.b16 %v940, %v937
        %v968 = vpack.c.b16 %v941, %v938
        %v969 = vpack.c.b16 %v942, %v939
        %v970 = vpack.c.b16 %v946, %v943
        %v971 = vpack.c.b16 %v947, %v944
        %v972 = vpack.c.b16 %v948, %v945
        %997 = vmatprep.subr.bf16.mxu0 %v950
        %998 = vmatpush1.bf16.msra.mxu0 %v949
        %999 = vmatprep.subr.bf16.mxu0 %v953
        %1000 = vmatpush1.bf16.msra.mxu0 %v952
        %1001 = vmatprep.subr.bf16.mxu0 %v956
        %1002 = vmatpush1.bf16.msra.mxu0 %v955
        %1003 = vmatprep.subr.bf16.mxu0 %v959
        %1004 = vmatpush1.bf16.msra.mxu0 %v958
        %1005 = vmatprep.subr.bf16.mxu0 %v962
        %1006 = vmatpush1.bf16.msra.mxu0 %v961
        %1007 = vmatprep.subr.bf16.mxu0 %v965
        %1008 = vmatpush1.bf16.msra.mxu0 %v964
        %1009 = vmatprep.subr.bf16.mxu0 %v968
        %1010 = vmatpush1.bf16.msra.mxu0 %v967
        %1011 = vmatprep.subr.bf16.mxu0 %v971
        %1012 = vmatpush1.bf16.msra.mxu0 %v970
        %1013 = vmatprep.subr.bf16.mxu0 0
        %1014 = vmatpush1.bf16.msra.mxu0 0
        %1015 = vmatprep.subr.bf16.mxu0 0
        %1016 = vmatpush1.bf16.msra.mxu0 0
        %1017 = vmatprep.subr.bf16.mxu0 0
        %1018 = vmatpush1.bf16.msra.mxu0 0
        %1019 = vmatprep.subr.bf16.mxu0 0
        %1020 = vmatpush1.bf16.msra.mxu0 0
        %1021 = vmatprep.subr.bf16.mxu0 0
        %1022 = vmatpush1.bf16.msra.mxu0 0
        %1023 = vmatprep.subr.bf16.mxu0 0
        %1024 = vmatpush1.bf16.msra.mxu0 0
        %1025 = vmatprep.subr.bf16.mxu0 0
        %1026 = vmatpush1.bf16.msra.mxu0 0
        %1027 = vmatprep.subr.bf16.mxu0 0
        %1028 = vmatpush1.bf16.msra.mxu0 0
        %1029 = vmatprep.mubr.bf16.mxu0 0
        %1030 = vmatmul.mubr.bf16.gmra.mrb[0].mxu0 %v819
        %v1031 = vpop.f32.mrb[0].mxu0
        %v1032 = vadd.f32 %v857, %v1031
        %v1033 = vpop.f32.mrb[0].mxu0
        %v1034 = vadd.f32 %v861, %v1033
        %v1035 = vpop.f32.mrb[0].mxu0
        %v1036 = vadd.f32 %v857, %v1035
        %v1037 = vpop.f32.mrb[0].mxu0
        %v1038 = vadd.f32 %v861, %v1037
        %1039 = vdwg.mxu0
        %1040 = vmatprep.subr.bf16.mxu0 0
        %1041 = vmatpush1.bf16.msra.mxu0 %v951
        %1042 = vmatprep.subr.bf16.mxu0 0
        %1043 = vmatpush1.bf16.msra.mxu0 %v954
        %1044 = vmatprep.subr.bf16.mxu0 0
        %1045 = vmatpush1.bf16.msra.mxu0 %v957
        %1046 = vmatprep.subr.bf16.mxu0 0
        %1047 = vmatpush1.bf16.msra.mxu0 %v960
        %1048 = vmatprep.subr.bf16.mxu0 0
        %1049 = vmatpush1.bf16.msra.mxu0 %v963
        %1050 = vmatprep.subr.bf16.mxu0 0
        %1051 = vmatpush1.bf16.msra.mxu0 %v966
        %1052 = vmatprep.subr.bf16.mxu0 0
        %1053 = vmatpush1.bf16.msra.mxu0 %v969
        %1054 = vmatprep.subr.bf16.mxu0 0
        %1055 = vmatpush1.bf16.msra.mxu0 %v972
        %1056 = vmatprep.subr.bf16.mxu0 0
        %1057 = vmatpush1.bf16.msra.mxu0 0
        %1058 = vmatprep.subr.bf16.mxu0 0
        %1059 = vmatpush1.bf16.msra.mxu0 0
        %1060 = vmatprep.subr.bf16.mxu0 0
        %1061 = vmatpush1.bf16.msra.mxu0 0
        %1062 = vmatprep.subr.bf16.mxu0 0
        %1063 = vmatpush1.bf16.msra.mxu0 0
        %1064 = vmatprep.subr.bf16.mxu0 0
        %1065 = vmatpush1.bf16.msra.mxu0 0
        %1066 = vmatprep.subr.bf16.mxu0 0
        %1067 = vmatpush1.bf16.msra.mxu0 0
        %1068 = vmatprep.subr.bf16.mxu0 0
        %1069 = vmatpush1.bf16.msra.mxu0 0
        %1070 = vmatprep.subr.bf16.mxu0 0
        %1071 = vmatpush1.bf16.msra.mxu0 0
        %1072 = vmatprep.mubr.bf16.mxu0 0
        %1073 = vmatmul.mubr.bf16.gmra.mrb[0].mxu0 %v819
        %v1074 = vpop.f32.mrb[0].mxu0
        %v1075 = vadd.f32 %v865, %v1074
        %v1076 = vpop.f32.mrb[0].mxu0
        %v1077 = vpop.f32.mrb[0].mxu0
        %v1078 = vadd.f32 %v865, %v1077
        %v1079 = vpop.f32.mrb[0].mxu0
        %1080 = vdwg.mxu0
        %v1081 = vpack.c.bf16 %v1032, %v1032
        %v1082 = vpack.c.bf16 %v1036, %v1036
        %v1083 = vpack.c.bf16 %v1034, %v1034
        %v1084 = vpack.c.bf16 %v1038, %v1038
        %v1085 = vpack.c.bf16 %v1075, %v1075
        %v1086 = vpack.c.bf16 %v1078, %v1078
        %vm1087 = vcmask 130048
        %v1089 = vsel %vm1087, %v1081, 0
        %v1092 = vsel %vm1087, %v1083, 0
        %1094 = vmatprep.subr.bf16.mxu0 0
        %1095 = vmatpush1.bf16.xpose.msra.mxu0 %v1092
        %1096 = vmatprep.subr.bf16.mxu0 0
        %1097 = vmatpush1.bf16.xpose.msra.mxu0 0
        %1098 = vmatprep.subr.bf16.mxu0 0
        %1099 = vmatpush1.bf16.xpose.msra.mxu0 0
        %1100 = vmatprep.subr.bf16.mxu0 0
        %1101 = vmatpush1.bf16.xpose.msra.mxu0 0
        %1102 = vmatprep.subr.bf16.mxu0 0
        %1103 = vmatpush1.bf16.xpose.msra.mxu0 0
        %1104 = vmatprep.subr.bf16.mxu0 0
        %1105 = vmatpush1.bf16.xpose.msra.mxu0 0
        %1106 = vmatprep.subr.bf16.mxu0 0
        %1107 = vmatpush1.bf16.xpose.msra.mxu0 0
        %1108 = vmatprep.subr.bf16.mxu0 0
        %1109 = vmatpush1.bf16.xpose.msra.mxu0 0
        %1110 = vmatprep.subr.bf16.mxu0 0
        %1111 = vmatpush1.bf16.xpose.msra.mxu0 0
        %1112 = vmatprep.subr.bf16.mxu0 0
        %1113 = vmatpush1.bf16.xpose.msra.mxu0 0
        %1114 = vmatprep.subr.bf16.mxu0 0
        %1115 = vmatpush1.bf16.xpose.msra.mxu0 0
        %1116 = vmatprep.subr.bf16.mxu0 0
        %1117 = vmatpush1.bf16.xpose.msra.mxu0 0
        %1118 = vmatprep.subr.bf16.mxu0 0
        %1119 = vmatpush1.bf16.xpose.msra.mxu0 0
        %1120 = vmatprep.subr.bf16.mxu0 0
        %1121 = vmatpush1.bf16.xpose.msra.mxu0 0
        %1122 = vmatprep.subr.bf16.mxu0 0
        %1123 = vmatpush1.bf16.xpose.msra.mxu0 0
        %1124 = vmatprep.subr.bf16.mxu0 0
        %1125 = vmatpush1.bf16.xpose.msra.mxu0 0
        %1126 = vmatprep.mubr.bf16.mxu0 0
        %1127 = vmatmul.mubr.bf16.gmra.mrb[0].mxu0 %v1089
        %v1128 = vpop.f32.mrb[0].mxu0
        %v1129 = vadd.f32 0.0, %v1128
        %v1130 = vpop.f32.mrb[0].mxu0
        %v1131 = vpop.f32.mrb[0].mxu0
        %v1132 = vpop.f32.mrb[0].mxu0
        %1133 = vdwg.mxu0
        %v1135 = vsel %vm1087, %v1082, 0
        %v1138 = vsel %vm1087, %v1084, 0
        %1140 = vmatprep.subr.bf16.mxu0 0
        %1141 = vmatpush1.bf16.xpose.msra.mxu0 %v1138
        %1142 = vmatprep.subr.bf16.mxu0 0
        %1143 = vmatpush1.bf16.xpose.msra.mxu0 0
        %1144 = vmatprep.subr.bf16.mxu0 0
        %1145 = vmatpush1.bf16.xpose.msra.mxu0 0
        %1146 = vmatprep.subr.bf16.mxu0 0
        %1147 = vmatpush1.bf16.xpose.msra.mxu0 0
        %1148 = vmatprep.subr.bf16.mxu0 0
        %1149 = vmatpush1.bf16.xpose.msra.mxu0 0
        %1150 = vmatprep.subr.bf16.mxu0 0
        %1151 = vmatpush1.bf16.xpose.msra.mxu0 0
        %1152 = vmatprep.subr.bf16.mxu0 0
        %1153 = vmatpush1.bf16.xpose.msra.mxu0 0
        %1154 = vmatprep.subr.bf16.mxu0 0
        %1155 = vmatpush1.bf16.xpose.msra.mxu0 0
        %1156 = vmatprep.subr.bf16.mxu0 0
        %1157 = vmatpush1.bf16.xpose.msra.mxu0 0
        %1158 = vmatprep.subr.bf16.mxu0 0
        %1159 = vmatpush1.bf16.xpose.msra.mxu0 0
        %1160 = vmatprep.subr.bf16.mxu0 0
        %1161 = vmatpush1.bf16.xpose.msra.mxu0 0
        %1162 = vmatprep.subr.bf16.mxu0 0
        %1163 = vmatpush1.bf16.xpose.msra.mxu0 0
        %1164 = vmatprep.subr.bf16.mxu0 0
        %1165 = vmatpush1.bf16.xpose.msra.mxu0 0
        %1166 = vmatprep.subr.bf16.mxu0 0
        %1167 = vmatpush1.bf16.xpose.msra.mxu0 0
        %1168 = vmatprep.subr.bf16.mxu0 0
        %1169 = vmatpush1.bf16.xpose.msra.mxu0 0
        %1170 = vmatprep.subr.bf16.mxu0 0
        %1171 = vmatpush1.bf16.xpose.msra.mxu0 0
        %1172 = vmatprep.mubr.bf16.mxu0 0
        %1173 = vmatmul.mubr.bf16.gmra.mrb[0].mxu0 %v1135
        %v1174 = vpop.f32.mrb[0].mxu0
        %v1175 = vadd.f32 0.0, %v1174
        %v1176 = vpop.f32.mrb[0].mxu0
        %v1177 = vpop.f32.mrb[0].mxu0
        %v1178 = vpop.f32.mrb[0].mxu0
        %1179 = vdwg.mxu0
        %vm1180 = vcmask 64512
        %v1181 = vsel %vm1180, %v1129, -inf
        %1182 = vmax.xlane.f32.xlu0 %v1181
        %v1183 = vpop.xlane.xlu0 %1182
        %v1184 = vsel %vm1180, %v1175, -inf
        %1185 = vmax.xlane.f32.xlu0 %v1184
        %v1186 = vpop.xlane.xlu0 %1185
        %v1187 = vsub.f32 %v1129, %v1183
        %v1188 = vsub.f32 %v1175, %v1186
        %v1189 = vmul.f32 %v1187, 1.442695
        %v1190 = vpow.pop %v1189
        %v1191 = vmul.f32 %v1188, 1.442695
        %v1192 = vpow.pop %v1191
        %v1193 = vsel %vm1180, %v1190, 0.0
        %1194 = vadd.xlane.f32.xlu0 %v1193
        %v1195 = vpop.xlane.xlu0 %1194
        %v1196 = vsel %vm1180, %v1192, 0.0
        %1197 = vadd.xlane.f32.xlu0 %v1196
        %v1198 = vpop.xlane.xlu0 %1197
        %v1199 = vrcp.pop %v1195
        %v1200 = vrcp.pop %v1198
        %v1201 = vmul.f32 %v1190, %v1199
        %v1202 = vmul.f32 %v1192, %v1200
        %v1203 = vpack.c.bf16 %v1201, %v1201
        %v1204 = vpack.c.bf16 %v1202, %v1202
        %v1206 = vsel %vm1180, %v1203, 0
        %vm1208 = vcmask 1043456
        %v1210 = vsel %vm1208, %v1085, 0
        %1212 = vmatprep.subr.bf16.mxu0 0
        %1213 = vmatpush1.bf16.msra.mxu0 %v1210
        %1214 = vmatprep.subr.bf16.mxu0 0
        %1215 = vmatpush1.bf16.msra.mxu0 0
        %1216 = vmatprep.subr.bf16.mxu0 0
        %1217 = vmatpush1.bf16.msra.mxu0 0
        %1218 = vmatprep.subr.bf16.mxu0 0
        %1219 = vmatpush1.bf16.msra.mxu0 0
        %1220 = vmatprep.subr.bf16.mxu0 0
        %1221 = vmatpush1.bf16.msra.mxu0 0
        %1222 = vmatprep.subr.bf16.mxu0 0
        %1223 = vmatpush1.bf16.msra.mxu0 0
        %1224 = vmatprep.subr.bf16.mxu0 0
        %1225 = vmatpush1.bf16.msra.mxu0 0
        %1226 = vmatprep.subr.bf16.mxu0 0
        %1227 = vmatpush1.bf16.msra.mxu0 0
        %1228 = vmatprep.subr.bf16.mxu0 0
        %1229 = vmatpush1.bf16.msra.mxu0 0
        %1230 = vmatprep.subr.bf16.mxu0 0
        %1231 = vmatpush1.bf16.msra.mxu0 0
        %1232 = vmatprep.subr.bf16.mxu0 0
        %1233 = vmatpush1.bf16.msra.mxu0 0
        %1234 = vmatprep.subr.bf16.mxu0 0
        %1235 = vmatpush1.bf16.msra.mxu0 0
        %1236 = vmatprep.subr.bf16.mxu0 0
        %1237 = vmatpush1.bf16.msra.mxu0 0
        %1238 = vmatprep.subr.bf16.mxu0 0
        %1239 = vmatpush1.bf16.msra.mxu0 0
        %1240 = vmatprep.subr.bf16.mxu0 0
        %1241 = vmatpush1.bf16.msra.mxu0 0
        %1242 = vmatprep.subr.bf16.mxu0 0
        %1243 = vmatpush1.bf16.msra.mxu0 0
        %1244 = vmatprep.mubr.bf16.mxu0 0
        %1245 = vmatmul.mubr.bf16.gmra.mrb[0].mxu0 %v1206
        %v1246 = vpop.f32.mrb[0].mxu0
        %v1247 = vadd.f32 0.0, %v1246
        %v1248 = vpop.f32.mrb[0].mxu0
        %v1249 = vpop.f32.mrb[0].mxu0
        %v1250 = vpop.f32.mrb[0].mxu0
        %1251 = vdwg.mxu0
        %v1253 = vsel %vm1180, %v1204, 0
        %v1256 = vsel %vm1208, %v1086, 0
        %1258 = vmatprep.subr.bf16.mxu0 0
        %1259 = vmatpush1.bf16.msra.mxu0 %v1256
        %1260 = vmatprep.subr.bf16.mxu0 0
        %1261 = vmatpush1.bf16.msra.mxu0 0
        %1262 = vmatprep.subr.bf16.mxu0 0
        %1263 = vmatpush1.bf16.msra.mxu0 0
        %1264 = vmatprep.subr.bf16.mxu0 0
        %1265 = vmatpush1.bf16.msra.mxu0 0
        %1266 = vmatprep.subr.bf16.mxu0 0
        %1267 = vmatpush1.bf16.msra.mxu0 0
        %1268 = vmatprep.subr.bf16.mxu0 0
        %1269 = vmatpush1.bf16.msra.mxu0 0
        %1270 = vmatprep.subr.bf16.mxu0 0
        %1271 = vmatpush1.bf16.msra.mxu0 0
        %1272 = vmatprep.subr.bf16.mxu0 0
        %1273 = vmatpush1.bf16.msra.mxu0 0
        %1274 = vmatprep.subr.bf16.mxu0 0
        %1275 = vmatpush1.bf16.msra.mxu0 0
        %1276 = vmatprep.subr.bf16.mxu0 0
        %1277 = vmatpush1.bf16.msra.mxu0 0
        %1278 = vmatprep.subr.bf16.mxu0 0
        %1279 = vmatpush1.bf16.msra.mxu0 0
        %1280 = vmatprep.subr.bf16.mxu0 0
        %1281 = vmatpush1.bf16.msra.mxu0 0
        %1282 = vmatprep.subr.bf16.mxu0 0
        %1283 = vmatpush1.bf16.msra.mxu0 0
        %1284 = vmatprep.subr.bf16.mxu0 0
        %1285 = vmatpush1.bf16.msra.mxu0 0
        %1286 = vmatprep.subr.bf16.mxu0 0
        %1287 = vmatpush1.bf16.msra.mxu0 0
        %1288 = vmatprep.subr.bf16.mxu0 0
        %1289 = vmatpush1.bf16.msra.mxu0 0
        %1290 = vmatprep.mubr.bf16.mxu0 0
        %1291 = vmatmul.mubr.bf16.gmra.mrb[0].mxu0 %v1253
        %v1292 = vpop.f32.mrb[0].mxu0
        %v1293 = vadd.f32 0.0, %v1292
        %v1294 = vpop.f32.mrb[0].mxu0
        %v1295 = vpop.f32.mrb[0].mxu0
        %v1296 = vpop.f32.mrb[0].mxu0
        %1297 = vdwg.mxu0
        %v1298 = vpack.c.bf16 %v1293, %v1247
        %v1299 = vld [vmem:[%s717] sm:$0xf]
        %v1300 = vld [vmem:[%s717 + $0x4] sm:$0xf]
        %1302 = vrot.lane.b32.xlu0 %v1081, 112
        %v1303 = vpop.permute.xlu0 %1302
        %1305 = vrot.lane.b32.xlu0 %v1083, 112
        %v1306 = vpop.permute.xlu0 %1305
        %v1308 = vsel %vm1087, %v1303, 0
        %v1311 = vsel %vm1087, %v1306, 0
        %1313 = vmatprep.subr.bf16.mxu0 0
        %1314 = vmatpush1.bf16.xpose.msra.mxu0 %v1311
        %1315 = vmatprep.subr.bf16.mxu0 0
        %1316 = vmatpush1.bf16.xpose.msra.mxu0 0
        %1317 = vmatprep.subr.bf16.mxu0 0
        %1318 = vmatpush1.bf16.xpose.msra.mxu0 0
        %1319 = vmatprep.subr.bf16.mxu0 0
        %1320 = vmatpush1.bf16.xpose.msra.mxu0 0
        %1321 = vmatprep.subr.bf16.mxu0 0
        %1322 = vmatpush1.bf16.xpose.msra.mxu0 0
        %1323 = vmatprep.subr.bf16.mxu0 0
        %1324 = vmatpush1.bf16.xpose.msra.mxu0 0
        %1325 = vmatprep.subr.bf16.mxu0 0
        %1326 = vmatpush1.bf16.xpose.msra.mxu0 0
        %1327 = vmatprep.subr.bf16.mxu0 0
        %1328 = vmatpush1.bf16.xpose.msra.mxu0 0
        %1329 = vmatprep.subr.bf16.mxu0 0
        %1330 = vmatpush1.bf16.xpose.msra.mxu0 0
        %1331 = vmatprep.subr.bf16.mxu0 0
        %1332 = vmatpush1.bf16.xpose.msra.mxu0 0
        %1333 = vmatprep.subr.bf16.mxu0 0
        %1334 = vmatpush1.bf16.xpose.msra.mxu0 0
        %1335 = vmatprep.subr.bf16.mxu0 0
        %1336 = vmatpush1.bf16.xpose.msra.mxu0 0
        %1337 = vmatprep.subr.bf16.mxu0 0
        %1338 = vmatpush1.bf16.xpose.msra.mxu0 0
        %1339 = vmatprep.subr.bf16.mxu0 0
        %1340 = vmatpush1.bf16.xpose.msra.mxu0 0
        %1341 = vmatprep.subr.bf16.mxu0 0
        %1342 = vmatpush1.bf16.xpose.msra.mxu0 0
        %1343 = vmatprep.subr.bf16.mxu0 0
        %1344 = vmatpush1.bf16.xpose.msra.mxu0 0
        %1345 = vmatprep.mubr.bf16.mxu0 0
        %1346 = vmatmul.mubr.bf16.gmra.mrb[0].mxu0 %v1308
        %v1347 = vpop.f32.mrb[0].mxu0
        %v1348 = vadd.f32 0.0, %v1347
        %v1349 = vpop.f32.mrb[0].mxu0
        %v1350 = vpop.f32.mrb[0].mxu0
        %v1351 = vpop.f32.mrb[0].mxu0
        %1352 = vdwg.mxu0
        %1354 = vrot.lane.b32.xlu0 %v1082, 112
        %v1355 = vpop.permute.xlu0 %1354
        %1357 = vrot.lane.b32.xlu0 %v1084, 112
        %v1358 = vpop.permute.xlu0 %1357
        %v1360 = vsel %vm1087, %v1355, 0
        %v1363 = vsel %vm1087, %v1358, 0
        %1365 = vmatprep.subr.bf16.mxu0 0
        %1366 = vmatpush1.bf16.xpose.msra.mxu0 %v1363
        %1367 = vmatprep.subr.bf16.mxu0 0
        %1368 = vmatpush1.bf16.xpose.msra.mxu0 0
        %1369 = vmatprep.subr.bf16.mxu0 0
        %1370 = vmatpush1.bf16.xpose.msra.mxu0 0
        %1371 = vmatprep.subr.bf16.mxu0 0
        %1372 = vmatpush1.bf16.xpose.msra.mxu0 0
        %1373 = vmatprep.subr.bf16.mxu0 0
        %1374 = vmatpush1.bf16.xpose.msra.mxu0 0
        %1375 = vmatprep.subr.bf16.mxu0 0
        %1376 = vmatpush1.bf16.xpose.msra.mxu0 0
        %1377 = vmatprep.subr.bf16.mxu0 0
        %1378 = vmatpush1.bf16.xpose.msra.mxu0 0
        %1379 = vmatprep.subr.bf16.mxu0 0
        %1380 = vmatpush1.bf16.xpose.msra.mxu0 0
        %1381 = vmatprep.subr.bf16.mxu0 0
        %1382 = vmatpush1.bf16.xpose.msra.mxu0 0
        %1383 = vmatprep.subr.bf16.mxu0 0
        %1384 = vmatpush1.bf16.xpose.msra.mxu0 0
        %1385 = vmatprep.subr.bf16.mxu0 0
        %1386 = vmatpush1.bf16.xpose.msra.mxu0 0
        %1387 = vmatprep.subr.bf16.mxu0 0
        %1388 = vmatpush1.bf16.xpose.msra.mxu0 0
        %1389 = vmatprep.subr.bf16.mxu0 0
        %1390 = vmatpush1.bf16.xpose.msra.mxu0 0
        %1391 = vmatprep.subr.bf16.mxu0 0
        %1392 = vmatpush1.bf16.xpose.msra.mxu0 0
        %1393 = vmatprep.subr.bf16.mxu0 0
        %1394 = vmatpush1.bf16.xpose.msra.mxu0 0
        %1395 = vmatprep.subr.bf16.mxu0 0
        %1396 = vmatpush1.bf16.xpose.msra.mxu0 0
        %1397 = vmatprep.mubr.bf16.mxu0 0
        %1398 = vmatmul.mubr.bf16.gmra.mrb[0].mxu0 %v1360
        %v1399 = vpop.f32.mrb[0].mxu0
        %v1400 = vadd.f32 0.0, %v1399
        %v1401 = vpop.f32.mrb[0].mxu0
        %v1402 = vpop.f32.mrb[0].mxu0
        %v1403 = vpop.f32.mrb[0].mxu0
        %1404 = vdwg.mxu0
        %v1405 = vsel %vm1180, %v1348, -inf
        %1406 = vmax.xlane.f32.xlu0 %v1405
        %v1407 = vpop.xlane.xlu0 %1406
        %v1408 = vsel %vm1180, %v1400, -inf
        %1409 = vmax.xlane.f32.xlu0 %v1408
        %v1410 = vpop.xlane.xlu0 %1409
        %v1411 = vsub.f32 %v1348, %v1407
        %v1412 = vsub.f32 %v1400, %v1410
        %v1413 = vmul.f32 %v1411, 1.442695
        %v1414 = vpow.pop %v1413
        %v1415 = vmul.f32 %v1412, 1.442695
        %v1416 = vpow.pop %v1415
        %v1417 = vsel %vm1180, %v1414, 0.0
        %1418 = vadd.xlane.f32.xlu0 %v1417
        %v1419 = vpop.xlane.xlu0 %1418
        %v1420 = vsel %vm1180, %v1416, 0.0
        %1421 = vadd.xlane.f32.xlu0 %v1420
        %v1422 = vpop.xlane.xlu0 %1421
        %v1423 = vrcp.pop %v1419
        %v1424 = vrcp.pop %v1422
        %v1425 = vmul.f32 %v1414, %v1423
        %v1426 = vmul.f32 %v1416, %v1424
        %v1427 = vpack.c.bf16 %v1425, %v1425
        %v1428 = vpack.c.bf16 %v1426, %v1426
        %1430 = vrot.lane.b32.xlu0 %v1085, 112
        %v1431 = vpop.permute.xlu0 %1430
        %v1433 = vsel %vm1180, %v1427, 0
        %v1436 = vsel %vm1208, %v1431, 0
        %1438 = vmatprep.subr.bf16.mxu0 0
        %1439 = vmatpush1.bf16.msra.mxu0 %v1436
        %1440 = vmatprep.subr.bf16.mxu0 0
        %1441 = vmatpush1.bf16.msra.mxu0 0
        %1442 = vmatprep.subr.bf16.mxu0 0
        %1443 = vmatpush1.bf16.msra.mxu0 0
        %1444 = vmatprep.subr.bf16.mxu0 0
        %1445 = vmatpush1.bf16.msra.mxu0 0
        %1446 = vmatprep.subr.bf16.mxu0 0
        %1447 = vmatpush1.bf16.msra.mxu0 0
        %1448 = vmatprep.subr.bf16.mxu0 0
        %1449 = vmatpush1.bf16.msra.mxu0 0
        %1450 = vmatprep.subr.bf16.mxu0 0
        %1451 = vmatpush1.bf16.msra.mxu0 0
        %1452 = vmatprep.subr.bf16.mxu0 0
        %1453 = vmatpush1.bf16.msra.mxu0 0
        %1454 = vmatprep.subr.bf16.mxu0 0
        %1455 = vmatpush1.bf16.msra.mxu0 0
        %1456 = vmatprep.subr.bf16.mxu0 0
        %1457 = vmatpush1.bf16.msra.mxu0 0
        %1458 = vmatprep.subr.bf16.mxu0 0
        %1459 = vmatpush1.bf16.msra.mxu0 0
        %1460 = vmatprep.subr.bf16.mxu0 0
        %1461 = vmatpush1.bf16.msra.mxu0 0
        %1462 = vmatprep.subr.bf16.mxu0 0
        %1463 = vmatpush1.bf16.msra.mxu0 0
        %1464 = vmatprep.subr.bf16.mxu0 0
        %1465 = vmatpush1.bf16.msra.mxu0 0
        %1466 = vmatprep.subr.bf16.mxu0 0
        %1467 = vmatpush1.bf16.msra.mxu0 0
        %1468 = vmatprep.subr.bf16.mxu0 0
        %1469 = vmatpush1.bf16.msra.mxu0 0
        %1470 = vmatprep.mubr.bf16.mxu0 0
        %1471 = vmatmul.mubr.bf16.gmra.mrb[0].mxu0 %v1433
        %v1472 = vpop.f32.mrb[0].mxu0
        %v1473 = vadd.f32 0.0, %v1472
        %v1474 = vpop.f32.mrb[0].mxu0
        %v1475 = vpop.f32.mrb[0].mxu0
        %v1476 = vpop.f32.mrb[0].mxu0
        %1477 = vdwg.mxu0
        %1479 = vrot.lane.b32.xlu0 %v1086, 112
        %v1480 = vpop.permute.xlu0 %1479
        %v1482 = vsel %vm1180, %v1428, 0
        %v1485 = vsel %vm1208, %v1480, 0
        %1487 = vmatprep.subr.bf16.mxu0 0
        %1488 = vmatpush1.bf16.msra.mxu0 %v1485
        %1489 = vmatprep.subr.bf16.mxu0 0
        %1490 = vmatpush1.bf16.msra.mxu0 0
        %1491 = vmatprep.subr.bf16.mxu0 0
        %1492 = vmatpush1.bf16.msra.mxu0 0
        %1493 = vmatprep.subr.bf16.mxu0 0
        %1494 = vmatpush1.bf16.msra.mxu0 0
        %1495 = vmatprep.subr.bf16.mxu0 0
        %1496 = vmatpush1.bf16.msra.mxu0 0
        %1497 = vmatprep.subr.bf16.mxu0 0
        %1498 = vmatpush1.bf16.msra.mxu0 0
        %1499 = vmatprep.subr.bf16.mxu0 0
        %1500 = vmatpush1.bf16.msra.mxu0 0
        %1501 = vmatprep.subr.bf16.mxu0 0
        %1502 = vmatpush1.bf16.msra.mxu0 0
        %1503 = vmatprep.subr.bf16.mxu0 0
        %1504 = vmatpush1.bf16.msra.mxu0 0
        %1505 = vmatprep.subr.bf16.mxu0 0
        %1506 = vmatpush1.bf16.msra.mxu0 0
        %1507 = vmatprep.subr.bf16.mxu0 0
        %1508 = vmatpush1.bf16.msra.mxu0 0
        %1509 = vmatprep.subr.bf16.mxu0 0
        %1510 = vmatpush1.bf16.msra.mxu0 0
        %1511 = vmatprep.subr.bf16.mxu0 0
        %1512 = vmatpush1.bf16.msra.mxu0 0
        %1513 = vmatprep.subr.bf16.mxu0 0
        %1514 = vmatpush1.bf16.msra.mxu0 0
        %1515 = vmatprep.subr.bf16.mxu0 0
        %1516 = vmatpush1.bf16.msra.mxu0 0
        %1517 = vmatprep.subr.bf16.mxu0 0
        %1518 = vmatpush1.bf16.msra.mxu0 0
        %1519 = vmatprep.mubr.bf16.mxu0 0
        %1520 = vmatmul.mubr.bf16.gmra.mrb[0].mxu0 %v1482
        %v1521 = vpop.f32.mrb[0].mxu0
        %v1522 = vadd.f32 0.0, %v1521
        %v1523 = vpop.f32.mrb[0].mxu0
        %v1524 = vpop.f32.mrb[0].mxu0
        %v1525 = vpop.f32.mrb[0].mxu0
        %1526 = vdwg.mxu0
        %v1527 = vpack.c.bf16 %v1522, %v1473
        %v1528 = vld [vmem:[%s717 + $0x8] sm:$0xf]
        %v1529 = vld [vmem:[%s717 + $0xc] sm:$0xf]
        %v1532 = vunpack.c.l.b16 %v1528
        %v1533 = vunpack.c.l.b16 %v1529
        %v1534 = vpack.c.b16 %v1533, %v1532
        %v1537 = vsel %vm1087, %v1527, 0
        %1539 = vmatprep.subr.bf16.mxu0 0
        %1540 = vmatpush1.bf16.msra.mxu0 %v1534
        %1541 = vmatprep.subr.bf16.mxu0 0
        %1542 = vmatpush1.bf16.msra.mxu0 0
        %1543 = vmatprep.subr.bf16.mxu0 0
        %1544 = vmatpush1.bf16.msra.mxu0 0
        %1545 = vmatprep.subr.bf16.mxu0 0
        %1546 = vmatpush1.bf16.msra.mxu0 0
        %1547 = vmatprep.subr.bf16.mxu0 0
        %1548 = vmatpush1.bf16.msra.mxu0 0
        %1549 = vmatprep.subr.bf16.mxu0 0
        %1550 = vmatpush1.bf16.msra.mxu0 0
        %1551 = vmatprep.subr.bf16.mxu0 0
        %1552 = vmatpush1.bf16.msra.mxu0 0
        %1553 = vmatprep.subr.bf16.mxu0 0
        %1554 = vmatpush1.bf16.msra.mxu0 0
        %1555 = vmatprep.subr.bf16.mxu0 0
        %1556 = vmatpush1.bf16.msra.mxu0 0
        %1557 = vmatprep.subr.bf16.mxu0 0
        %1558 = vmatpush1.bf16.msra.mxu0 0
        %1559 = vmatprep.subr.bf16.mxu0 0
        %1560 = vmatpush1.bf16.msra.mxu0 0
        %1561 = vmatprep.subr.bf16.mxu0 0
        %1562 = vmatpush1.bf16.msra.mxu0 0
        %1563 = vmatprep.subr.bf16.mxu0 0
        %1564 = vmatpush1.bf16.msra.mxu0 0
        %1565 = vmatprep.subr.bf16.mxu0 0
        %1566 = vmatpush1.bf16.msra.mxu0 0
        %1567 = vmatprep.subr.bf16.mxu0 0
        %1568 = vmatpush1.bf16.msra.mxu0 0
        %1569 = vmatprep.subr.bf16.mxu0 0
        %1570 = vmatpush1.bf16.msra.mxu0 0
        %1571 = vmatprep.mubr.bf16.mxu0 0
        %1572 = vmatmul.mubr.bf16.gmra.mrb[0].mxu0 %v1537
        %v1573 = vpop.f32.mrb[0].mxu0
        %v1574 = vadd.f32 0.0, %v1573
        %v1575 = vpop.f32.mrb[0].mxu0
        %v1576 = vpop.f32.mrb[0].mxu0
        %v1577 = vadd.f32 0.0, %v1576
        %v1578 = vpop.f32.mrb[0].mxu0
        %1579 = vdwg.mxu0
        %v1582 = vunpack.c.l.b16 %v1299
        %v1583 = vunpack.c.l.b16 %v1300
        %v1584 = vpack.c.b16 %v1583, %v1582
        %v1587 = vsel %vm1087, %v1298, 0
        %1589 = vmatprep.subr.bf16.mxu0 0
        %1590 = vmatpush1.bf16.msra.mxu0 %v1584
        %1591 = vmatprep.subr.bf16.mxu0 0
        %1592 = vmatpush1.bf16.msra.mxu0 0
        %1593 = vmatprep.subr.bf16.mxu0 0
        %1594 = vmatpush1.bf16.msra.mxu0 0
        %1595 = vmatprep.subr.bf16.mxu0 0
        %1596 = vmatpush1.bf16.msra.mxu0 0
        %1597 = vmatprep.subr.bf16.mxu0 0
        %1598 = vmatpush1.bf16.msra.mxu0 0
        %1599 = vmatprep.subr.bf16.mxu0 0
        %1600 = vmatpush1.bf16.msra.mxu0 0
        %1601 = vmatprep.subr.bf16.mxu0 0
        %1602 = vmatpush1.bf16.msra.mxu0 0
        %1603 = vmatprep.subr.bf16.mxu0 0
        %1604 = vmatpush1.bf16.msra.mxu0 0
        %1605 = vmatprep.subr.bf16.mxu0 0
        %1606 = vmatpush1.bf16.msra.mxu0 0
        %1607 = vmatprep.subr.bf16.mxu0 0
        %1608 = vmatpush1.bf16.msra.mxu0 0
        %1609 = vmatprep.subr.bf16.mxu0 0
        %1610 = vmatpush1.bf16.msra.mxu0 0
        %1611 = vmatprep.subr.bf16.mxu0 0
        %1612 = vmatpush1.bf16.msra.mxu0 0
        %1613 = vmatprep.subr.bf16.mxu0 0
        %1614 = vmatpush1.bf16.msra.mxu0 0
        %1615 = vmatprep.subr.bf16.mxu0 0
        %1616 = vmatpush1.bf16.msra.mxu0 0
        %1617 = vmatprep.subr.bf16.mxu0 0
        %1618 = vmatpush1.bf16.msra.mxu0 0
        %1619 = vmatprep.subr.bf16.mxu0 0
        %1620 = vmatpush1.bf16.msra.mxu0 0
        %1621 = vmatprep.mubr.bf16.mxu0 0
        %1622 = vmatmul.mubr.bf16.gmra.mrb[0].mxu0 %v1587
        %v1623 = vpop.f32.mrb[0].mxu0
        %v1624 = vadd.f32 %v1574, %v1623
        %v1625 = vpop.f32.mrb[0].mxu0
        %v1626 = vpop.f32.mrb[0].mxu0
        %v1627 = vadd.f32 %v1577, %v1626
        %v1628 = vpop.f32.mrb[0].mxu0
        %1629 = vdwg.mxu0
        %v1630 = vld [vmem:[%s720] sm:$0x1]
        %v1632 = vlaneseq
        %v1633 = vshrl.u32 %v1632, 7
        %v1634 = vsub.s32 0, %v1633
        %v1635 = vrot.slane %v1630, %v1634
        %v1637 = vadd.f32 %v1624, %v1635
        %v1638 = vadd.f32 %v1627, %v1635
        %v1639 = vadd.f32 %v817, %v1637
        %v1640 = vadd.f32 %v818, %v1638
        %v1641 = vld [vmem:[%s723] sm:$0x1]
        %v1642 = vld [vmem:[%s726] sm:$0x1]
        %1643 = vadd.xlane.f32.xlu0 %v1639
        %v1644 = vpop.xlane.xlu0 %1643
        %1645 = vadd.xlane.f32.xlu0 %v1640
        %v1646 = vpop.xlane.xlu0 %1645
        %v1647 = vmul.f32 %v1644, 0.03125
        %v1648 = vmul.f32 %v1646, 0.03125
        %v1649 = vmul.f32 %v1639, %v1639
        %v1650 = vmul.f32 %v1640, %v1640
        %1651 = vadd.xlane.f32.xlu0 %v1649
        %v1652 = vpop.xlane.xlu0 %1651
        %1653 = vadd.xlane.f32.xlu0 %v1650
        %v1654 = vpop.xlane.xlu0 %1653
        %v1655 = vmul.f32 %v1652, 0.03125
        %v1656 = vmul.f32 %v1654, 0.03125
        %v1657 = vmul.f32 %v1647, %v1647
        %v1658 = vmul.f32 %v1648, %v1648
        %v1659 = vsub.f32 %v1655, %v1657
        %v1660 = vsub.f32 %v1656, %v1658
        %v1661 = vmax.f32 %v1659, 0.0
        %v1662 = vmax.f32 %v1660, 0.0
        %v1663 = vsub.f32 %v1639, %v1647
        %v1664 = vsub.f32 %v1640, %v1648
        %v1665 = vadd.f32 %v1661, 1e-05
        %v1666 = vadd.f32 %v1662, 1e-05
        %v1667 = vrsqrt.pop %v1665
        %v1668 = vrsqrt.pop %v1666
        %v1669 = vmul.f32 %v1663, %v1667
        %v1670 = vmul.f32 %v1664, %v1668
        %v1672 = vlaneseq
        %v1673 = vshrl.u32 %v1672, 7
        %v1674 = vsub.s32 0, %v1673
        %v1675 = vrot.slane %v1641, %v1674
        %v1677 = vmul.f32 %v1669, %v1675
        %v1678 = vmul.f32 %v1670, %v1675
        %v1680 = vlaneseq
        %v1681 = vshrl.u32 %v1680, 7
        %v1682 = vsub.s32 0, %v1681
        %v1683 = vrot.slane %v1642, %v1682
        %v1685 = vadd.f32 %v1677, %v1683
        %v1686 = vadd.f32 %v1678, %v1683
        %v1687 = vpack.c.bf16 %v1686, %v1685
        %v1688 = vld [vmem:[%s731] sm:$0xf]
        %v1689 = vld [vmem:[%s731 + $0x4] sm:$0xf]
        %v1690 = vld [vmem:[%s731 + $0x8] sm:$0xf]
        %v1691 = vld [vmem:[%s731 + $0xc] sm:$0xf]
        %v1692 = vld [vmem:[%s731 + $0x10] sm:$0xf]
        %v1693 = vld [vmem:[%s731 + $0x14] sm:$0xf]
        %v1694 = vld [vmem:[%s731 + $0x18] sm:$0xf]
        %v1695 = vld [vmem:[%s731 + $0x1c] sm:$0xf]
        %v1696 = vld [vmem:[%s731 + $0x20] sm:$0xf]
        %v1697 = vld [vmem:[%s731 + $0x24] sm:$0xf]
        %v1698 = vld [vmem:[%s731 + $0x28] sm:$0xf]
        %v1699 = vld [vmem:[%s731 + $0x2c] sm:$0xf]
        %v1700 = vld [vmem:[%s731 + $0x30] sm:$0xf]
        %v1701 = vld [vmem:[%s731 + $0x34] sm:$0xf]
        %v1702 = vld [vmem:[%s731 + $0x38] sm:$0xf]
        %v1703 = vld [vmem:[%s731 + $0x3c] sm:$0xf]
        %v1704 = vld [vmem:[%s734] sm:$0x1]
        %v1706 = vlaneseq
        %v1707 = vshrl.u32 %v1706, 7
        %v1708 = vsub.s32 0, %v1707
        %v1709 = vrot.slane %v1704, %v1708
        %v1727 = vunpack.c.l.b16 %v1688
        %v1728 = vunpack.c.l.b16 %v1689
        %v1729 = vunpack.c.l.b16 %v1690
        %v1730 = vunpack.c.l.b16 %v1691
        %v1731 = vunpack.c.l.b16 %v1692
        %v1732 = vunpack.c.l.b16 %v1693
        %v1733 = vunpack.c.l.b16 %v1694
        %v1734 = vunpack.c.l.b16 %v1695
        %v1735 = vunpack.c.l.b16 %v1696
        %v1736 = vunpack.c.l.b16 %v1697
        %v1737 = vunpack.c.l.b16 %v1698
        %v1738 = vunpack.c.l.b16 %v1699
        %v1739 = vunpack.c.l.b16 %v1700
        %v1740 = vunpack.c.l.b16 %v1701
        %v1741 = vunpack.c.l.b16 %v1702
        %v1742 = vunpack.c.l.b16 %v1703
        %v1743 = vpack.c.b16 %v1728, %v1727
        %v1744 = vpack.c.b16 %v1730, %v1729
        %v1745 = vpack.c.b16 %v1732, %v1731
        %v1746 = vpack.c.b16 %v1734, %v1733
        %v1747 = vpack.c.b16 %v1736, %v1735
        %v1748 = vpack.c.b16 %v1738, %v1737
        %v1749 = vpack.c.b16 %v1740, %v1739
        %v1750 = vpack.c.b16 %v1742, %v1741
        %1759 = vmatprep.subr.bf16.mxu0 0
        %1760 = vmatpush1.bf16.msra.mxu0 %v1743
        %1761 = vmatprep.subr.bf16.mxu0 0
        %1762 = vmatpush1.bf16.msra.mxu0 %v1744
        %1763 = vmatprep.subr.bf16.mxu0 0
        %1764 = vmatpush1.bf16.msra.mxu0 %v1745
        %1765 = vmatprep.subr.bf16.mxu0 0
        %1766 = vmatpush1.bf16.msra.mxu0 %v1746
        %1767 = vmatprep.subr.bf16.mxu0 0
        %1768 = vmatpush1.bf16.msra.mxu0 %v1747
        %1769 = vmatprep.subr.bf16.mxu0 0
        %1770 = vmatpush1.bf16.msra.mxu0 %v1748
        %1771 = vmatprep.subr.bf16.mxu0 0
        %1772 = vmatpush1.bf16.msra.mxu0 %v1749
        %1773 = vmatprep.subr.bf16.mxu0 0
        %1774 = vmatpush1.bf16.msra.mxu0 %v1750
        %1775 = vmatprep.subr.bf16.mxu0 0
        %1776 = vmatpush1.bf16.msra.mxu0 0
        %1777 = vmatprep.subr.bf16.mxu0 0
        %1778 = vmatpush1.bf16.msra.mxu0 0
        %1779 = vmatprep.subr.bf16.mxu0 0
        %1780 = vmatpush1.bf16.msra.mxu0 0
        %1781 = vmatprep.subr.bf16.mxu0 0
        %1782 = vmatpush1.bf16.msra.mxu0 0
        %1783 = vmatprep.subr.bf16.mxu0 0
        %1784 = vmatpush1.bf16.msra.mxu0 0
        %1785 = vmatprep.subr.bf16.mxu0 0
        %1786 = vmatpush1.bf16.msra.mxu0 0
        %1787 = vmatprep.subr.bf16.mxu0 0
        %1788 = vmatpush1.bf16.msra.mxu0 0
        %1789 = vmatprep.subr.bf16.mxu0 0
        %1790 = vmatpush1.bf16.msra.mxu0 0
        %1791 = vmatprep.mubr.bf16.mxu0 0
        %1792 = vmatmul.mubr.bf16.gmra.mrb[0].mxu0 %v1687
        %v1793 = vpop.f32.mrb[0].mxu0
        %v1794 = vadd.f32 %v1709, %v1793
        %v1795 = vpop.f32.mrb[0].mxu0
        %v1796 = vpop.f32.mrb[0].mxu0
        %v1797 = vadd.f32 %v1709, %v1796
        %v1798 = vpop.f32.mrb[0].mxu0
        %1799 = vdwg.mxu0
        %v1800 = vmax.f32 %v1794, 0.0
        %v1801 = vmax.f32 %v1797, 0.0
        %v1802 = vpack.c.bf16 %v1801, %v1800
        %v1803 = vld [vmem:[%s739] sm:$0xf]
        %v1804 = vld [vmem:[%s739 + $0x4] sm:$0xf]
        %v1805 = vld [vmem:[%s739 + $0x8] sm:$0xf]
        %v1806 = vld [vmem:[%s739 + $0xc] sm:$0xf]
        %v1807 = vld [vmem:[%s739 + $0x10] sm:$0xf]
        %v1808 = vld [vmem:[%s739 + $0x14] sm:$0xf]
        %v1809 = vld [vmem:[%s739 + $0x18] sm:$0xf]
        %v1810 = vld [vmem:[%s739 + $0x1c] sm:$0xf]
        %v1811 = vld [vmem:[%s739 + $0x20] sm:$0xf]
        %v1812 = vld [vmem:[%s739 + $0x24] sm:$0xf]
        %v1813 = vld [vmem:[%s739 + $0x28] sm:$0xf]
        %v1814 = vld [vmem:[%s739 + $0x2c] sm:$0xf]
        %v1815 = vld [vmem:[%s739 + $0x30] sm:$0xf]
        %v1816 = vld [vmem:[%s739 + $0x34] sm:$0xf]
        %v1817 = vld [vmem:[%s739 + $0x38] sm:$0xf]
        %v1818 = vld [vmem:[%s739 + $0x3c] sm:$0xf]
        %v1819 = vld [vmem:[%s742] sm:$0x1]
        %v1821 = vlaneseq
        %v1822 = vshrl.u32 %v1821, 7
        %v1823 = vsub.s32 0, %v1822
        %v1824 = vrot.slane %v1819, %v1823
        %v1842 = vunpack.c.l.b16 %v1803
        %v1843 = vunpack.c.l.b16 %v1804
        %v1844 = vunpack.c.l.b16 %v1805
        %v1845 = vunpack.c.l.b16 %v1806
        %v1846 = vunpack.c.l.b16 %v1807
        %v1847 = vunpack.c.l.b16 %v1808
        %v1848 = vunpack.c.l.b16 %v1809
        %v1849 = vunpack.c.l.b16 %v1810
        %v1850 = vunpack.c.l.b16 %v1811
        %v1851 = vunpack.c.l.b16 %v1812
        %v1852 = vunpack.c.l.b16 %v1813
        %v1853 = vunpack.c.l.b16 %v1814
        %v1854 = vunpack.c.l.b16 %v1815
        %v1855 = vunpack.c.l.b16 %v1816
        %v1856 = vunpack.c.l.b16 %v1817
        %v1857 = vunpack.c.l.b16 %v1818
        %v1858 = vpack.c.b16 %v1843, %v1842
        %v1859 = vpack.c.b16 %v1845, %v1844
        %v1860 = vpack.c.b16 %v1847, %v1846
        %v1861 = vpack.c.b16 %v1849, %v1848
        %v1862 = vpack.c.b16 %v1851, %v1850
        %v1863 = vpack.c.b16 %v1853, %v1852
        %v1864 = vpack.c.b16 %v1855, %v1854
        %v1865 = vpack.c.b16 %v1857, %v1856
        %1874 = vmatprep.subr.bf16.mxu0 0
        %1875 = vmatpush1.bf16.msra.mxu0 %v1858
        %1876 = vmatprep.subr.bf16.mxu0 0
        %1877 = vmatpush1.bf16.msra.mxu0 %v1859
        %1878 = vmatprep.subr.bf16.mxu0 0
        %1879 = vmatpush1.bf16.msra.mxu0 %v1860
        %1880 = vmatprep.subr.bf16.mxu0 0
        %1881 = vmatpush1.bf16.msra.mxu0 %v1861
        %1882 = vmatprep.subr.bf16.mxu0 0
        %1883 = vmatpush1.bf16.msra.mxu0 %v1862
        %1884 = vmatprep.subr.bf16.mxu0 0
        %1885 = vmatpush1.bf16.msra.mxu0 %v1863
        %1886 = vmatprep.subr.bf16.mxu0 0
        %1887 = vmatpush1.bf16.msra.mxu0 %v1864
        %1888 = vmatprep.subr.bf16.mxu0 0
        %1889 = vmatpush1.bf16.msra.mxu0 %v1865
        %1890 = vmatprep.subr.bf16.mxu0 0
        %1891 = vmatpush1.bf16.msra.mxu0 0
        %1892 = vmatprep.subr.bf16.mxu0 0
        %1893 = vmatpush1.bf16.msra.mxu0 0
        %1894 = vmatprep.subr.bf16.mxu0 0
        %1895 = vmatpush1.bf16.msra.mxu0 0
        %1896 = vmatprep.subr.bf16.mxu0 0
        %1897 = vmatpush1.bf16.msra.mxu0 0
        %1898 = vmatprep.subr.bf16.mxu0 0
        %1899 = vmatpush1.bf16.msra.mxu0 0
        %1900 = vmatprep.subr.bf16.mxu0 0
        %1901 = vmatpush1.bf16.msra.mxu0 0
        %1902 = vmatprep.subr.bf16.mxu0 0
        %1903 = vmatpush1.bf16.msra.mxu0 0
        %1904 = vmatprep.subr.bf16.mxu0 0
        %1905 = vmatpush1.bf16.msra.mxu0 0
        %1906 = vmatprep.mubr.bf16.mxu0 0
        %1907 = vmatmul.mubr.bf16.gmra.mrb[0].mxu0 %v1802
        %v1908 = vpop.f32.mrb[0].mxu0
        %v1909 = vadd.f32 %v1824, %v1908
        %v1910 = vpop.f32.mrb[0].mxu0
        %v1911 = vpop.f32.mrb[0].mxu0
        %v1912 = vadd.f32 %v1824, %v1911
        %v1913 = vpop.f32.mrb[0].mxu0
        %1914 = vdwg.mxu0
        %v1915 = vadd.f32 %v1685, %v1909
        %v1916 = vadd.f32 %v1686, %v1912
        %v1917 = vld [vmem:[%s745] sm:$0x1]
        %v1918 = vld [vmem:[%s748] sm:$0x1]
        %1919 = vadd.xlane.f32.xlu0 %v1915
        %v1920 = vpop.xlane.xlu0 %1919
        %1921 = vadd.xlane.f32.xlu0 %v1916
        %v1922 = vpop.xlane.xlu0 %1921
        %v1923 = vmul.f32 %v1920, 0.03125
        %v1924 = vmul.f32 %v1922, 0.03125
        %v1925 = vmul.f32 %v1915, %v1915
        %v1926 = vmul.f32 %v1916, %v1916
        %1927 = vadd.xlane.f32.xlu0 %v1925
        %v1928 = vpop.xlane.xlu0 %1927
        %1929 = vadd.xlane.f32.xlu0 %v1926
        %v1930 = vpop.xlane.xlu0 %1929
        %v1931 = vmul.f32 %v1928, 0.03125
        %v1932 = vmul.f32 %v1930, 0.03125
        %v1933 = vmul.f32 %v1923, %v1923
        %v1934 = vmul.f32 %v1924, %v1924
        %v1935 = vsub.f32 %v1931, %v1933
        %v1936 = vsub.f32 %v1932, %v1934
        %v1937 = vmax.f32 %v1935, 0.0
        %v1938 = vmax.f32 %v1936, 0.0
        %v1939 = vsub.f32 %v1915, %v1923
        %v1940 = vsub.f32 %v1916, %v1924
        %v1941 = vadd.f32 %v1937, 1e-05
        %v1942 = vadd.f32 %v1938, 1e-05
        %v1943 = vrsqrt.pop %v1941
        %v1944 = vrsqrt.pop %v1942
        %v1945 = vmul.f32 %v1939, %v1943
        %v1946 = vmul.f32 %v1940, %v1944
        %v1948 = vlaneseq
        %v1949 = vshrl.u32 %v1948, 7
        %v1950 = vsub.s32 0, %v1949
        %v1951 = vrot.slane %v1917, %v1950
        %v1953 = vmul.f32 %v1945, %v1951
        %v1954 = vmul.f32 %v1946, %v1951
        %v1956 = vlaneseq
        %v1957 = vshrl.u32 %v1956, 7
        %v1958 = vsub.s32 0, %v1957
        %v1959 = vrot.slane %v1918, %v1958
        %v1961 = vadd.f32 %v1953, %v1959
        %v1962 = vadd.f32 %v1954, %v1959
        %1963 = vst [vmem:[#allocation2] sm:$0xff] %v1961
        %1964 = vst [vmem:[#allocation2 + $0x8] sm:$0xff] %v1962
        %p1965 = scmp.eq.s32.totalorder %s34, 1
        // Predicated region
        $region93: #{transformer_forward.1} parent=87 // pred_check
          %p1966 = pneg %p1965
        $region94: #{transformer_forward.1} parent=87 // pred_check_branch
          %1968 = sbr.rel (%p1966) target = $region96
        $region95: #{transformer_forward.1} parent=87 // pred_region
          %1969 = vadd.xlane.f32.xlu0 %v1961
          %v1970 = vpop.xlane.xlu0 %1969
          %1971 = vadd.xlane.f32.xlu0 %v1962
          %v1972 = vpop.xlane.xlu0 %1971
          %v1973 = vmul.f32 %v1970, 0.03125
          %v1974 = vmul.f32 %v1972, 0.03125
          %v1975 = vld [vmem:[%s15] sm:$0xff]
          %v1976 = vld [vmem:[%s16] sm:$0x1]
          %v1978 = vlaneseq
          %v1979 = vshrl.u32 %v1978, 7
          %v1980 = vsub.s32 0, %v1979
          %v1981 = vrot.slane %v1976, %v1980
          %v1985 = vlaneseq
          %v1986 = vand.u32 %v1985, 127
          %v1987 = vlaneseq
          %v1988 = vshrl.u32 %v1987, 7
          %v1989 = vsub.s32 %v1986, %v1988
          %v1990 = vrot.slane %v1973, %v1989
          %v1991 = vlaneseq
          %v1992 = vshrl.u32 %v1991, 7
          %v1993 = vsub.s32 %v1986, %v1992
          %v1994 = vrot.slane %v1974, %v1993
          %vm1995 = vcmask 1041409
          %v1996 = vsel %vm1995, %v1994, %v1990
          %v1997 = vsel %vm1180, %v1996, 0
          %1999 = vmatprep.subr.mxu0 0.0
          %2000 = vmatpush1.msra.mxu0 %v1975
          %2001 = vmatprep.subr.mxu0 0.0
          %2002 = vmatpush1.msra.mxu0 0.0
          %2003 = vmatprep.subr.mxu0 0.0
          %2004 = vmatpush1.msra.mxu0 0.0
          %2005 = vmatprep.subr.mxu0 0.0
          %2006 = vmatpush1.msra.mxu0 0.0
          %2007 = vmatprep.subr.mxu0 0.0
          %2008 = vmatpush1.msra.mxu0 0.0
          %2009 = vmatprep.subr.mxu0 0.0
          %2010 = vmatpush1.msra.mxu0 0.0
          %2011 = vmatprep.subr.mxu0 0.0
          %2012 = vmatpush1.msra.mxu0 0.0
          %2013 = vmatprep.subr.mxu0 0.0
          %2014 = vmatpush1.msra.mxu0 0.0
          %2015 = vmatprep.subr.mxu0 0.0
          %2016 = vmatpush1.msra.mxu0 0.0
          %2017 = vmatprep.subr.mxu0 0.0
          %2018 = vmatpush1.msra.mxu0 0.0
          %2019 = vmatprep.subr.mxu0 0.0
          %2020 = vmatpush1.msra.mxu0 0.0
          %2021 = vmatprep.subr.mxu0 0.0
          %2022 = vmatpush1.msra.mxu0 0.0
          %2023 = vmatprep.subr.mxu0 0.0
          %2024 = vmatpush1.msra.mxu0 0.0
          %2025 = vmatprep.subr.mxu0 0.0
          %2026 = vmatpush1.msra.mxu0 0.0
          %2027 = vmatprep.subr.mxu0 0.0
          %2028 = vmatpush1.msra.mxu0 0.0
          %2029 = vmatprep.subr.mxu0 0.0
          %2030 = vmatpush1.msra.mxu0 0.0
          %2031 = vmatprep.subr.mxu0 0.0
          %2032 = vmatpush1.msra.mxu0 0.0
          %2033 = vmatprep.subr.mxu0 0.0
          %2034 = vmatpush1.msra.mxu0 0.0
          %2035 = vmatprep.subr.mxu0 0.0
          %2036 = vmatpush1.msra.mxu0 0.0
          %2037 = vmatprep.subr.mxu0 0.0
          %2038 = vmatpush1.msra.mxu0 0.0
          %2039 = vmatprep.subr.mxu0 0.0
          %2040 = vmatpush1.msra.mxu0 0.0
          %2041 = vmatprep.subr.mxu0 0.0
          %2042 = vmatpush1.msra.mxu0 0.0
          %2043 = vmatprep.subr.mxu0 0.0
          %2044 = vmatpush1.msra.mxu0 0.0
          %2045 = vmatprep.subr.mxu0 0.0
          %2046 = vmatpush1.msra.mxu0 0.0
          %2047 = vmatprep.subr.mxu0 0.0
          %2048 = vmatpush1.msra.mxu0 0.0
          %2049 = vmatprep.subr.mxu0 0.0
          %2050 = vmatpush1.msra.mxu0 0.0
          %2051 = vmatprep.subr.mxu0 0.0
          %2052 = vmatpush1.msra.mxu0 0.0
          %2053 = vmatprep.subr.mxu0 0.0
          %2054 = vmatpush1.msra.mxu0 0.0
          %2055 = vmatprep.subr.mxu0 0.0
          %2056 = vmatpush1.msra.mxu0 0.0
          %2057 = vmatprep.subr.mxu0 0.0
          %2058 = vmatpush1.msra.mxu0 0.0
          %2059 = vmatprep.subr.mxu0 0.0
          %2060 = vmatpush1.msra.mxu0 0.0
          %2061 = vmatprep.subr.mxu0 0.0
          %2062 = vmatpush1.msra.mxu0 0.0
          %2063 = vmatprep.mubr.f32.mxu0 0.0
          %2064 = vmatmul.mubr.f32.gmra.mrb[0].mxu0 %v1997
          %v2065 = vpop.f32.mrb[0].mxu0
          %v2066 = vadd.f32 %v1981, %v2065
          %v2067 = vpop.f32.mrb[0].mxu0
          %2068 = vdwg.mxu0
          %vm2069 = vcmask 25600
          %v2070 = vsel %vm2069, %v2066, -inf
          %2071 = vmax.xlane.f32.xlu0 %v2070
          %v2072 = vpop.xlane.xlu0 %2071
          %v2073 = vsub.f32 %v2066, %v2072
          %v2074 = vmul.f32 %v2073, 1.442695
          %v2075 = vpow.pop %v2074
          %v2076 = vsel %vm2069, %v2075, 0.0
          %2077 = vadd.xlane.f32.xlu0 %v2076
          %v2078 = vpop.xlane.xlu0 %2077
          %v2079 = vrcp.pop %v2078
          %v2080 = vmul.f32 %v2075, %v2079
          %v2083 = vunpack.c.l.s4 1966171168
          %v2084 = vunpack.c.0.s8 %v2083
          %v2085 = vlaneseq
          %v2086 = vshrl.u32 %v2085, 7
          %v2087 = vsub.s32 %v2084, %v2086
          %v2088 = vrot.slane %v2080, %v2087
          %v2089 = vcombine.high %v2088, %v2088
          %v2091 = vunpack.c.l.s4 1966171168
          %v2092 = vunpack.c.0.s8 %v2091
          %v2093 = vlaneseq
          %v2094 = vshrl.u32 %v2093, 7
          %v2095 = vsub.s32 %v2092, %v2094
          %v2096 = vrot.slane %v2088, %v2095
          %v2098 = vunpack.c.l.s4 1966171168
          %v2099 = vunpack.c.0.s8 %v2098
          %v2100 = vlaneseq
          %v2101 = vshrl.u32 %v2100, 7
          %v2102 = vsub.s32 %v2099, %v2101
          %v2103 = vrot.slane %v2089, %v2102
          %vm2106 = vcmask 24576
          %2107 = vst.msk [vmem:[#allocation3] sm:$0x1] %vm2106, %v2096
          %2108 = vst.msk [vmem:[#allocation3 + $0x1] sm:$0x1] %vm2106, %v2103
        $region96: #{transformer_forward.1} parent=87 // pred_fallthru
          _
        // Predicated region
        $region97: #{transformer_forward.1} parent=87 // pred_check
          %p2109 = pneg %p481
        $region98: #{transformer_forward.1} parent=87 // pred_check_branch
          %2111 = sbr.rel (%p2109) target = $region100
        $region99: #{transformer_forward.1} parent=87 // pred_region
          %s2112 = smul.u32 2, %s33
          %s2114 = ssub.s32 32, 32
          %2115 = vsyncadd [#allocation4], %s2114
          %s2116 = smul.addr %s2112, 16
          %s2117 = scalar_lea.hbm %s17, %s2116
          %s2118 = sshll.u32 [#allocation3], 4
          %s2119 = int_to_ptr.vmem [resolvable:$true] %s2118
          %2124 = dma.vmem_to_hbm [thread:$0]  %s2119, 32, %s2117, [#allocation4], 16, 16, 1
        $region100: #{transformer_forward.1} parent=87 // pred_fallthru
          _
        // Predicated region
        $region101: #{transformer_forward.1} parent=87 // pred_check
          %p2125 = pneg %p481
        $region102: #{transformer_forward.1} parent=87 // pred_check_branch
          %2127 = sbr.rel (%p2125) target = $region104
        $region103: #{transformer_forward.1} parent=87 // pred_region
          %2128 = dma.done [#allocation4], 32
        $region104: #{transformer_forward.1} parent=87 // pred_fallthru
          _
      $region88: #{transformer_forward.1} parent=5 // pred_fallthru
        _
      %p2129 = scmp.le.s32.totalorder 2, %s24
      // Predicated region
      $region105: #{transformer_forward.1} parent=5 // pred_check
        %p2130 = pneg %p2129
      $region106: #{transformer_forward.1} parent=5 // pred_check_branch
        %2132 = sbr.rel (%p2130) target = $region108
      $region107: #{transformer_forward.1} parent=5 // pred_region
        %s2133 = ssub.s32 %s24, 2
      $region108: #{transformer_forward.1} parent=5 // pred_fallthru
        _
    $region6: #{transformer_forward.1} parent=1 // loop_footer
      %s28 = sadd.s32 1, %s24
    $region7: #{transformer_forward.1} parent=1 // loop_footer_branch
      %23 = sbr.rel target = $region3
    $region8: #{transformer_forward.1} parent=1 // loop_exit
      _
    %2134 = vsyncpa [#allocation4], 1
    %s2135 = scalar_lea.sflag [#allocation4], 1
    %2136 = vsyncpa %s2135, 1

</llo_original>
